<compile_context>
chip_gen: v6e
topology: v6e:2x2x1
jax: 0.10.0
libtpu: 0.0.40
codegen_flags: <defaults>
</compile_context>

<pallas_src>
import math
import numpy as np
import jax
import jax.numpy as jnp
from jax.experimental import pallas as pl
from jax.experimental.pallas import tpu as pltpu


# ----------------------------------------------------------------------------
# Deterministic "parameters" (gaussian kernel) and helper matrices
# ----------------------------------------------------------------------------
def _make_gaussian_1d(kernel_size=5, sigma=1.0):
    coords = np.arange(kernel_size, dtype=np.float32) - kernel_size // 2
    g = np.exp(-(coords ** 2) / (2.0 * sigma ** 2))
    g = g / g.sum()  # outer(g, g) == the module's normalized 2-D gaussian
    return g.astype(np.float32)


def _gauss_band(n, g1d):
    """(n, n) symmetric matrix A: A @ x == 1-D 'same' gaussian conv, zero pad."""
    k = g1d.shape[0]
    r = k // 2
    A = np.zeros((n, n), np.float32)
    for h in range(n):
        for i in range(k):
            m = h + i - r
            if 0 <= m < n:
                A[h, m] = g1d[i]
    return A


def _pool_mat(n):
    """(n//2, n): P @ x (and x @ P.T) == avg_pool2d(x, 2) along that axis."""
    P = np.zeros((n // 2, n), np.float32)
    for p in range(n // 2):
        P[p, 2 * p] = 0.5
        P[p, 2 * p + 1] = 0.5
    return P


def _win_mat(n):
    """(n//2+1, n): W @ x sums a 4-wide, stride-2, pad-2 window (zeros clipped)."""
    L = n // 2 + 1
    M = np.zeros((L, n), np.float32)
    for p in range(L):
        for i in range(4):
            m = 2 * p + i - 2
            if 0 <= m < n:
                M[p, m] = 1.0
    return M


# ----------------------------------------------------------------------------
# Pallas kernel: one lane-packed slab of K planes per grid step.
# Writes four partial SSE sums into its own (8, 128) output tile.
# ----------------------------------------------------------------------------
def _texture_loss_kernel(t_ref, s_ref,
                         g0r_ref, g0c_ref, p0r_ref, p0c_ref,
                         g1r_ref, g1c_ref, p1r_ref, p1c_ref,
                         wr_ref, wc_ref, out_ref):
    f32 = jnp.float32
    t = t_ref[...]                      # (H, K*W), f32
    s = s_ref[...]

    def mm(a, b):
        return jnp.dot(a, b, preferred_element_type=f32)

    def sandwich(rmat, x, cmat):
        # rows first (cheaper: rmat is small), then block-diagonal column op
        return mm(rmat, mm(x, cmat))

    # ---- structural texture: pyramid of the (linear) difference ----
    d = t - s
    b0 = sandwich(g0r_ref[...], d, g0c_ref[...])        # 5x5 gaussian blur
    sse_lap0 = jnp.sum((d - b0) ** 2)
    q0 = sandwich(p0r_ref[...], b0, p0c_ref[...])        # avg_pool2d(., 2)
    b1 = sandwich(g1r_ref[...], q0, g1c_ref[...])
    sse_lap1 = jnp.sum((q0 - b1) ** 2)
    q1 = sandwich(p1r_ref[...], b1, p1c_ref[...])
    sse_pool = jnp.sum(q1 ** 2)

    # ---- statistical texture: unfold(4, stride=2, pad=2) patch standardize ---
    # Per-patch sum / sum-of-squares / cross-sum via 4x4 window-sum matmuls;
    # the normalized MSE is then a closed form per patch (no 16x16 patch
    # planes ever materialized).
    wr = wr_ref[...]                    # (L, H)
    wc = wc_ref[...]                    # (K*W, K*L) block-diagonal
    S_t = sandwich(wr, t, wc)           # (L, K*L)  sum of patch elements
    S_s = sandwich(wr, s, wc)
    Q_t = sandwich(wr, t * t, wc)       # sum of squares
    Q_s = sandwich(wr, s * s, wc)
    C_ts = sandwich(wr, t * s, wc)      # cross sum

    inv16 = f32(1.0 / 16.0)
    inv15 = f32(1.0 / 15.0)
    css_t = jnp.maximum(Q_t - S_t * S_t * inv16, 0.0)    # sum (t - mean_t)^2
    css_s = jnp.maximum(Q_s - S_s * S_s * inv16, 0.0)
    cross = C_ts - S_t * S_s * inv16                     # sum (t-mt)(s-ms)
    t_den = jnp.sqrt(css_t * inv15) + 1e-6               # unbiased std + eps
    s_den = jnp.sqrt(css_s * inv15) + 1e-6
    inv_t = 1.0 / t_den
    inv_s = 1.0 / s_den
    sse_stat = jnp.sum(css_t * inv_t * inv_t
                       + css_s * inv_s * inv_s
                       - 2.0 * cross * inv_t * inv_s)

    # ---- write this tile's partial sums to its own (8, 128) output block ----
    row = jax.lax.broadcasted_iota(jnp.int32, out_ref.shape, 0)
    out_ref[...] = (jnp.where(row == 0, sse_lap0, 0.0)
                    + jnp.where(row == 1, sse_lap1, 0.0)
                    + jnp.where(row == 2, sse_pool, 0.0)
                    + jnp.where(row == 3, sse_stat, 0.0)).astype(out_ref.dtype)


# ----------------------------------------------------------------------------
# Wrapper
# ----------------------------------------------------------------------------
def _texture_loss_pair(teacher_embed, student_embed):
    B, N, C = teacher_embed.shape
    H = int(math.isqrt(N))
    assert H * H == N and H % 4 == 0, "N must be a square with side % 4 == 0"
    W = H
    H2, W2, H4, W4 = H // 2, W // 2, H // 4, W // 4
    L = H // 2 + 1
    BC = B * C

    # planes packed along the lane axis: K planes side-by-side -> >=256 lanes
    K = max(1, 256 // W) if W < 256 else 1
    num_tiles = -(-BC // K)             # ceil
    BCp = num_tiles * K
    KW, KW2, KW4, KL = K * W, K * W2, K * W4, K * L

    def to_packed(x):                   # [B, N, C] -> (num_tiles, H, K*W)
        img = jnp.transpose(x, (0, 2, 1)).reshape(B, C, H, W)
        img = img.reshape(BC, H, W).astype(jnp.float32)
        if BCp > BC:                    # zero planes contribute 0 to every SSE
            img = jnp.concatenate(
                [img, jnp.zeros((BCp - BC, H, W), jnp.float32)], axis=0)
        return img.reshape(num_tiles, K, H, W).transpose(0, 2, 1, 3) \
                  .reshape(num_tiles, H, KW)

    t_packed = to_packed(teacher_embed)
    s_packed = to_packed(student_embed)

    # constant operators (built once, constant index_map -> DMA'd once)
    g1d = _make_gaussian_1d(kernel_size=5, sigma=1.0)
    I_K = np.eye(K, dtype=np.float32)
    g0r = jnp.asarray(_gauss_band(H, g1d))                     # (H, H)
    g0c = jnp.asarray(np.kron(I_K, _gauss_band(W, g1d)))       # (KW, KW)
    p0r = jnp.asarray(_pool_mat(H))                            # (H2, H)
    p0c = jnp.asarray(np.kron(I_K, _pool_mat(W).T))            # (KW, KW2)
    g1r = jnp.asarray(_gauss_band(H2, g1d))                    # (H2, H2)
    g1c = jnp.asarray(np.kron(I_K, _gauss_band(W2, g1d)))      # (KW2, KW2)
    p1r = jnp.asarray(_pool_mat(H2))                           # (H4, H2)
    p1c = jnp.asarray(np.kron(I_K, _pool_mat(W2).T))           # (KW2, KW4)
    wr = jnp.asarray(_win_mat(H))                              # (L, H)
    wc = jnp.asarray(np.kron(I_K, _win_mat(W).T))              # (KW, KL)

    c2 = lambda i: (0, 0)
    c3 = lambda i: (i, 0, 0)

    out = pl.pallas_call(
        _texture_loss_kernel,
        out_shape=jax.ShapeDtypeStruct((num_tiles, 8, 128), jnp.float32),
        grid_spec=pltpu.PrefetchScalarGridSpec(
            num_scalar_prefetch=0,
            grid=(num_tiles,),
            in_specs=[
                pl.BlockSpec((None, H, KW), c3),    # teacher slab
                pl.BlockSpec((None, H, KW), c3),    # student slab
                pl.BlockSpec((H, H), c2),
                pl.BlockSpec((KW, KW), c2),
                pl.BlockSpec((H2, H), c2),
                pl.BlockSpec((KW, KW2), c2),
                pl.BlockSpec((H2, H2), c2),
                pl.BlockSpec((KW2, KW2), c2),
                pl.BlockSpec((H4, H2), c2),
                pl.BlockSpec((KW2, KW4), c2),
                pl.BlockSpec((L, H), c2),
                pl.BlockSpec((KW, KL), c2),
            ],
            out_specs=pl.BlockSpec((None, 8, 128), c3),
        ),
        compiler_params=pltpu.CompilerParams(
            dimension_semantics=("parallel",),       # distinct out block / step
            vmem_limit_bytes=32 * 1024 * 1024),
    )(t_packed, s_packed, g0r, g0c, p0r, p0c, g1r, g1c, p1r, p1c, wr, wc)

    sums = jnp.sum(out[:, :4, 0], axis=0)            # f32 reduction in wrapper
    struct_loss = (sums[0] / (BC * H * W)
                   + sums[1] / (BC * H2 * W2)
                   + sums[2] / (BC * H4 * W4))
    stat_loss = sums[3] / (BC * 16 * L * L)
    return struct_loss, stat_loss


def texture_distillation_loss(teacher_embeds, student_embeds):
    """Matches TextureDistillationLoss.forward (returns the scalar total loss)."""
    if not isinstance(teacher_embeds, (list, tuple)):
        teacher_embeds = [teacher_embeds]
    if not isinstance(student_embeds, (list, tuple)):
        student_embeds = [student_embeds]
    assert len(teacher_embeds) == len(student_embeds)
    total_struct = 0.0
    total_stat = 0.0
    for t_emb, s_emb in zip(teacher_embeds, student_embeds):
        st, sa = _texture_loss_pair(t_emb, s_emb)
        total_struct = total_struct + st
        total_stat = total_stat + sa
    n = len(teacher_embeds)
    return total_struct / n + total_stat / n


# ----------------------------------------------------------------------------
# Pure-JAX reference (independent math: explicit pad / conv / pool / unfold)
# ----------------------------------------------------------------------------
def _reference_loss(t_emb, s_emb):
    B, N, C = t_emb.shape
    H = int(math.isqrt(N))
    g1d = _make_gaussian_1d()
    Kmat = np.outer(g1d, g1d)

    def to_img(x):
        return jnp.transpose(x, (0, 2, 1)).reshape(B, C, H, H).astype(jnp.float32)

    def blur(x):
        _, _, h, w = x.shape
        xp = jnp.pad(x, ((0, 0), (0, 0), (2, 2), (2, 2)))
        out = jnp.zeros_like(x)
        for i in range(5):
            for j in range(5):
                out = out + Kmat[i, j] * xp[:, :, i:i + h, j:j + w]
        return out

    def pool(x):
        b, c, h, w = x.shape
        return x.reshape(b, c, h // 2, 2, w // 2, 2).mean(axis=(3, 5))

    def pyramid(x):
        b0 = blur(x); l0 = x - b0; q0 = pool(b0)
        b1 = blur(q0); l1 = q0 - b1; q1 = pool(b1)
        return [l0, l1, q1]

    def stat(x):
        b, c, h, w = x.shape
        xp = jnp.pad(x, ((0, 0), (0, 0), (2, 2), (2, 2)))
        L = h // 2 + 1
        planes = []
        for di in range(4):
            for dj in range(4):
                planes.append(xp[:, :, di:di + 2 * L:2, dj:dj + 2 * L:2])
        p = jnp.stack(planes, axis=2)                 # (B, C, 16, L, L)
        m = p.mean(axis=2, keepdims=True)
        v = jnp.sum((p - m) ** 2, axis=2, keepdims=True) / 15.0
        return (p - m) / (jnp.sqrt(v) + 1e-6)

    t_img, s_img = to_img(t_emb), to_img(s_emb)
    struct = sum(jnp.mean((a - b) ** 2) for a, b in zip(pyramid(t_img), pyramid(s_img)))
    stat_l = jnp.mean((stat(t_img) - stat(s_img)) ** 2)
    return struct + stat_l


if __name__ == "__main__":
    key = jax.random.PRNGKey(0)
    k1, k2 = jax.random.split(key)
    # B*C = 24 planes -> 2 lane-packed tiles of 16 (exercises the padding path)
    B, C, H = 2, 12, 16
    N = H * H
    teacher = jax.random.normal(k1, (B, N, C), dtype=jnp.float32)   # [B, N, C]
    student = jax.random.normal(k2, (B, N, C), dtype=jnp.float32)

    loss = texture_distillation_loss(teacher, student)
    loss = jax.block_until_ready(loss)

    ref = jax.block_until_ready(_reference_loss(teacher, student))
    np.testing.assert_allclose(float(loss), float(ref), rtol=1e-2, atol=1e-4)
    print("KERNEL_OK")
</pallas_src>

<mosaic_0001>
module attributes {stable_mosaic.version = 11 : i64} {
  func.func @_texture_loss_kernel(%arg0: i32, %arg1: memref<1x16x256xf32, #tpu.memory_space<vmem>>, %arg2: memref<1x16x256xf32, #tpu.memory_space<vmem>>, %arg3: memref<16x16xf32, #tpu.memory_space<vmem>>, %arg4: memref<256x256xf32, #tpu.memory_space<vmem>>, %arg5: memref<8x16xf32, #tpu.memory_space<vmem>>, %arg6: memref<256x128xf32, #tpu.memory_space<vmem>>, %arg7: memref<8x8xf32, #tpu.memory_space<vmem>>, %arg8: memref<128x128xf32, #tpu.memory_space<vmem>>, %arg9: memref<4x8xf32, #tpu.memory_space<vmem>>, %arg10: memref<128x64xf32, #tpu.memory_space<vmem>>, %arg11: memref<9x16xf32, #tpu.memory_space<vmem>>, %arg12: memref<256x144xf32, #tpu.memory_space<vmem>>, %arg13: memref<1x8x128xf32, #tpu.memory_space<vmem>>) attributes {dimension_semantics = [#tpu.dimension_semantics<parallel>], iteration_bounds = array<i64: 2>, scalar_prefetch = 0 : i64, scratch_operands = 0 : i64, tpu.core_type = #tpu.core_type<tc>, window_params = [{transform_indices = @transform_0, window_bounds = array<i64: 1, 16, 256>}, {transform_indices = @transform_1, window_bounds = array<i64: 1, 16, 256>}, {pipeline_mode = #tpu.pipeline_mode<synchronous>, transform_indices = @transform_2, window_bounds = array<i64: 16, 16>}, {pipeline_mode = #tpu.pipeline_mode<synchronous>, transform_indices = @transform_3, window_bounds = array<i64: 256, 256>}, {pipeline_mode = #tpu.pipeline_mode<synchronous>, transform_indices = @transform_4, window_bounds = array<i64: 8, 16>}, {pipeline_mode = #tpu.pipeline_mode<synchronous>, transform_indices = @transform_5, window_bounds = array<i64: 256, 128>}, {pipeline_mode = #tpu.pipeline_mode<synchronous>, transform_indices = @transform_6, window_bounds = array<i64: 8, 8>}, {pipeline_mode = #tpu.pipeline_mode<synchronous>, transform_indices = @transform_7, window_bounds = array<i64: 128, 128>}, {pipeline_mode = #tpu.pipeline_mode<synchronous>, transform_indices = @transform_8, window_bounds = array<i64: 4, 8>}, {pipeline_mode = #tpu.pipeline_mode<synchronous>, transform_indices = @transform_9, window_bounds = array<i64: 128, 64>}, {pipeline_mode = #tpu.pipeline_mode<synchronous>, transform_indices = @transform_10, window_bounds = array<i64: 9, 16>}, {pipeline_mode = #tpu.pipeline_mode<synchronous>, transform_indices = @transform_11, window_bounds = array<i64: 256, 144>}, {transform_indices = @transform_12, window_bounds = array<i64: 1, 8, 128>}]} {
    %c0 = arith.constant 0 : index
    %c0_0 = arith.constant 0 : index
    %c0_1 = arith.constant 0 : index
    %0 = vector.load %arg1[%c0, %c0_0, %c0_1] : memref<1x16x256xf32, #tpu.memory_space<vmem>>, vector<1x16x256xf32>
    %1 = vector.shape_cast %0 : vector<1x16x256xf32> to vector<16x256xf32>
    %c0_2 = arith.constant 0 : index
    %c0_3 = arith.constant 0 : index
    %c0_4 = arith.constant 0 : index
    %2 = vector.load %arg2[%c0_2, %c0_3, %c0_4] : memref<1x16x256xf32, #tpu.memory_space<vmem>>, vector<1x16x256xf32>
    %3 = vector.shape_cast %2 : vector<1x16x256xf32> to vector<16x256xf32>
    %4 = arith.subf %1, %3 : vector<16x256xf32>
    %c0_5 = arith.constant 0 : index
    %c0_6 = arith.constant 0 : index
    %5 = vector.load %arg3[%c0_5, %c0_6] : memref<16x16xf32, #tpu.memory_space<vmem>>, vector<16x16xf32>
    %c0_7 = arith.constant 0 : index
    %c0_8 = arith.constant 0 : index
    %6 = vector.load %arg4[%c0_7, %c0_8] : memref<256x256xf32, #tpu.memory_space<vmem>>, vector<256x256xf32>
    %cst = arith.constant dense<0.000000e+00> : vector<16x256xf32>
    %7 = tpu.matmul %4, %6, %cst {dimension_numbers = #tpu.dot_dimension_numbers<[1], [0], [0], [1], [0, 0, 1, 1], [], []>} : vector<16x256xf32>, vector<256x256xf32>, vector<16x256xf32> -> vector<16x256xf32>
    %cst_9 = arith.constant dense<0.000000e+00> : vector<16x256xf32>
    %8 = tpu.matmul %5, %7, %cst_9 {dimension_numbers = #tpu.dot_dimension_numbers<[1], [0], [0], [1], [0, 0, 1, 1], [], []>} : vector<16x16xf32>, vector<16x256xf32>, vector<16x256xf32> -> vector<16x256xf32>
    %9 = arith.subf %4, %8 : vector<16x256xf32>
    %10 = arith.mulf %9, %9 : vector<16x256xf32>
    %11 = vector.shape_cast %10 : vector<16x256xf32> to vector<1x16x256xf32>
    %cst_10 = arith.constant dense<0.000000e+00> : vector<1xf32>
    %12 = vector.multi_reduction <add>, %11, %cst_10 [1, 2] : vector<1x16x256xf32> to vector<1xf32>
    %13 = vector.shape_cast %12 : vector<1xf32> to vector<1x1x1xf32>
    %14 = vector.extract %13[0, 0, 0] : f32 from vector<1x1x1xf32>
    %c0_11 = arith.constant 0 : index
    %c0_12 = arith.constant 0 : index
    %15 = vector.load %arg5[%c0_11, %c0_12] : memref<8x16xf32, #tpu.memory_space<vmem>>, vector<8x16xf32>
    %c0_13 = arith.constant 0 : index
    %c0_14 = arith.constant 0 : index
    %16 = vector.load %arg6[%c0_13, %c0_14] : memref<256x128xf32, #tpu.memory_space<vmem>>, vector<256x128xf32>
    %cst_15 = arith.constant dense<0.000000e+00> : vector<16x128xf32>
    %17 = tpu.matmul %8, %16, %cst_15 {dimension_numbers = #tpu.dot_dimension_numbers<[1], [0], [0], [1], [0, 0, 1, 1], [], []>} : vector<16x256xf32>, vector<256x128xf32>, vector<16x128xf32> -> vector<16x128xf32>
    %cst_16 = arith.constant dense<0.000000e+00> : vector<8x128xf32>
    %18 = tpu.matmul %15, %17, %cst_16 {dimension_numbers = #tpu.dot_dimension_numbers<[1], [0], [0], [1], [0, 0, 1, 1], [], []>} : vector<8x16xf32>, vector<16x128xf32>, vector<8x128xf32> -> vector<8x128xf32>
    %c0_17 = arith.constant 0 : index
    %c0_18 = arith.constant 0 : index
    %19 = vector.load %arg7[%c0_17, %c0_18] : memref<8x8xf32, #tpu.memory_space<vmem>>, vector<8x8xf32>
    %c0_19 = arith.constant 0 : index
    %c0_20 = arith.constant 0 : index
    %20 = vector.load %arg8[%c0_19, %c0_20] : memref<128x128xf32, #tpu.memory_space<vmem>>, vector<128x128xf32>
    %cst_21 = arith.constant dense<0.000000e+00> : vector<8x128xf32>
    %21 = tpu.matmul %18, %20, %cst_21 {dimension_numbers = #tpu.dot_dimension_numbers<[1], [0], [0], [1], [0, 0, 1, 1], [], []>} : vector<8x128xf32>, vector<128x128xf32>, vector<8x128xf32> -> vector<8x128xf32>
    %cst_22 = arith.constant dense<0.000000e+00> : vector<8x128xf32>
    %22 = tpu.matmul %19, %21, %cst_22 {dimension_numbers = #tpu.dot_dimension_numbers<[1], [0], [0], [1], [0, 0, 1, 1], [], []>} : vector<8x8xf32>, vector<8x128xf32>, vector<8x128xf32> -> vector<8x128xf32>
    %23 = arith.subf %18, %22 : vector<8x128xf32>
    %24 = arith.mulf %23, %23 : vector<8x128xf32>
    %25 = vector.shape_cast %24 : vector<8x128xf32> to vector<1x8x128xf32>
    %cst_23 = arith.constant dense<0.000000e+00> : vector<1xf32>
    %26 = vector.multi_reduction <add>, %25, %cst_23 [1, 2] : vector<1x8x128xf32> to vector<1xf32>
    %27 = vector.shape_cast %26 : vector<1xf32> to vector<1x1x1xf32>
    %28 = vector.extract %27[0, 0, 0] : f32 from vector<1x1x1xf32>
    %c0_24 = arith.constant 0 : index
    %c0_25 = arith.constant 0 : index
    %29 = vector.load %arg9[%c0_24, %c0_25] : memref<4x8xf32, #tpu.memory_space<vmem>>, vector<4x8xf32>
    %c0_26 = arith.constant 0 : index
    %c0_27 = arith.constant 0 : index
    %30 = vector.load %arg10[%c0_26, %c0_27] : memref<128x64xf32, #tpu.memory_space<vmem>>, vector<128x64xf32>
    %cst_28 = arith.constant dense<0.000000e+00> : vector<8x64xf32>
    %31 = tpu.matmul %22, %30, %cst_28 {dimension_numbers = #tpu.dot_dimension_numbers<[1], [0], [0], [1], [0, 0, 1, 1], [], []>} : vector<8x128xf32>, vector<128x64xf32>, vector<8x64xf32> -> vector<8x64xf32>
    %cst_29 = arith.constant dense<0.000000e+00> : vector<4x64xf32>
    %32 = tpu.matmul %29, %31, %cst_29 {dimension_numbers = #tpu.dot_dimension_numbers<[1], [0], [0], [1], [0, 0, 1, 1], [], []>} : vector<4x8xf32>, vector<8x64xf32>, vector<4x64xf32> -> vector<4x64xf32>
    %33 = arith.mulf %32, %32 : vector<4x64xf32>
    %34 = vector.shape_cast %33 : vector<4x64xf32> to vector<1x4x64xf32>
    %cst_30 = arith.constant dense<0.000000e+00> : vector<1xf32>
    %35 = vector.multi_reduction <add>, %34, %cst_30 [1, 2] : vector<1x4x64xf32> to vector<1xf32>
    %36 = vector.shape_cast %35 : vector<1xf32> to vector<1x1x1xf32>
    %37 = vector.extract %36[0, 0, 0] : f32 from vector<1x1x1xf32>
    %c0_31 = arith.constant 0 : index
    %c0_32 = arith.constant 0 : index
    %38 = vector.load %arg11[%c0_31, %c0_32] : memref<9x16xf32, #tpu.memory_space<vmem>>, vector<9x16xf32>
    %c0_33 = arith.constant 0 : index
    %c0_34 = arith.constant 0 : index
    %39 = vector.load %arg12[%c0_33, %c0_34] : memref<256x144xf32, #tpu.memory_space<vmem>>, vector<256x144xf32>
    %cst_35 = arith.constant dense<0.000000e+00> : vector<16x144xf32>
    %40 = tpu.matmul %1, %39, %cst_35 {dimension_numbers = #tpu.dot_dimension_numbers<[1], [0], [0], [1], [0, 0, 1, 1], [], []>} : vector<16x256xf32>, vector<256x144xf32>, vector<16x144xf32> -> vector<16x144xf32>
    %cst_36 = arith.constant dense<0.000000e+00> : vector<9x144xf32>
    %41 = tpu.matmul %38, %40, %cst_36 {dimension_numbers = #tpu.dot_dimension_numbers<[1], [0], [0], [1], [0, 0, 1, 1], [], []>} : vector<9x16xf32>, vector<16x144xf32>, vector<9x144xf32> -> vector<9x144xf32>
    %cst_37 = arith.constant dense<0.000000e+00> : vector<16x144xf32>
    %42 = tpu.matmul %3, %39, %cst_37 {dimension_numbers = #tpu.dot_dimension_numbers<[1], [0], [0], [1], [0, 0, 1, 1], [], []>} : vector<16x256xf32>, vector<256x144xf32>, vector<16x144xf32> -> vector<16x144xf32>
    %cst_38 = arith.constant dense<0.000000e+00> : vector<9x144xf32>
    %43 = tpu.matmul %38, %42, %cst_38 {dimension_numbers = #tpu.dot_dimension_numbers<[1], [0], [0], [1], [0, 0, 1, 1], [], []>} : vector<9x16xf32>, vector<16x144xf32>, vector<9x144xf32> -> vector<9x144xf32>
    %44 = arith.mulf %1, %1 : vector<16x256xf32>
    %cst_39 = arith.constant dense<0.000000e+00> : vector<16x144xf32>
    %45 = tpu.matmul %44, %39, %cst_39 {dimension_numbers = #tpu.dot_dimension_numbers<[1], [0], [0], [1], [0, 0, 1, 1], [], []>} : vector<16x256xf32>, vector<256x144xf32>, vector<16x144xf32> -> vector<16x144xf32>
    %cst_40 = arith.constant dense<0.000000e+00> : vector<9x144xf32>
    %46 = tpu.matmul %38, %45, %cst_40 {dimension_numbers = #tpu.dot_dimension_numbers<[1], [0], [0], [1], [0, 0, 1, 1], [], []>} : vector<9x16xf32>, vector<16x144xf32>, vector<9x144xf32> -> vector<9x144xf32>
    %47 = arith.mulf %3, %3 : vector<16x256xf32>
    %cst_41 = arith.constant dense<0.000000e+00> : vector<16x144xf32>
    %48 = tpu.matmul %47, %39, %cst_41 {dimension_numbers = #tpu.dot_dimension_numbers<[1], [0], [0], [1], [0, 0, 1, 1], [], []>} : vector<16x256xf32>, vector<256x144xf32>, vector<16x144xf32> -> vector<16x144xf32>
    %cst_42 = arith.constant dense<0.000000e+00> : vector<9x144xf32>
    %49 = tpu.matmul %38, %48, %cst_42 {dimension_numbers = #tpu.dot_dimension_numbers<[1], [0], [0], [1], [0, 0, 1, 1], [], []>} : vector<9x16xf32>, vector<16x144xf32>, vector<9x144xf32> -> vector<9x144xf32>
    %50 = arith.mulf %1, %3 : vector<16x256xf32>
    %cst_43 = arith.constant dense<0.000000e+00> : vector<16x144xf32>
    %51 = tpu.matmul %50, %39, %cst_43 {dimension_numbers = #tpu.dot_dimension_numbers<[1], [0], [0], [1], [0, 0, 1, 1], [], []>} : vector<16x256xf32>, vector<256x144xf32>, vector<16x144xf32> -> vector<16x144xf32>
    %cst_44 = arith.constant dense<0.000000e+00> : vector<9x144xf32>
    %52 = tpu.matmul %38, %51, %cst_44 {dimension_numbers = #tpu.dot_dimension_numbers<[1], [0], [0], [1], [0, 0, 1, 1], [], []>} : vector<9x16xf32>, vector<16x144xf32>, vector<9x144xf32> -> vector<9x144xf32>
    %53 = arith.mulf %41, %41 : vector<9x144xf32>
    %cst_45 = arith.constant 6.250000e-02 : f32
    %54 = vector.broadcast %cst_45 : f32 to vector<9x144xf32>
    %55 = arith.mulf %53, %54 : vector<9x144xf32>
    %56 = arith.subf %46, %55 : vector<9x144xf32>
    %cst_46 = arith.constant 0.000000e+00 : f32
    %57 = vector.broadcast %cst_46 : f32 to vector<9x144xf32>
    %58 = arith.maximumf %56, %57 : vector<9x144xf32>
    %59 = arith.mulf %43, %43 : vector<9x144xf32>
    %cst_47 = arith.constant 6.250000e-02 : f32
    %60 = vector.broadcast %cst_47 : f32 to vector<9x144xf32>
    %61 = arith.mulf %59, %60 : vector<9x144xf32>
    %62 = arith.subf %49, %61 : vector<9x144xf32>
    %cst_48 = arith.constant 0.000000e+00 : f32
    %63 = vector.broadcast %cst_48 : f32 to vector<9x144xf32>
    %64 = arith.maximumf %62, %63 : vector<9x144xf32>
    %65 = arith.mulf %41, %43 : vector<9x144xf32>
    %cst_49 = arith.constant 6.250000e-02 : f32
    %66 = vector.broadcast %cst_49 : f32 to vector<9x144xf32>
    %67 = arith.mulf %65, %66 : vector<9x144xf32>
    %68 = arith.subf %52, %67 : vector<9x144xf32>
    %cst_50 = arith.constant 0.0666666701 : f32
    %69 = vector.broadcast %cst_50 : f32 to vector<9x144xf32>
    %70 = arith.mulf %58, %69 : vector<9x144xf32>
    %71 = math.sqrt %70 : vector<9x144xf32>
    %cst_51 = arith.constant 9.99999997E-7 : f32
    %72 = vector.broadcast %cst_51 : f32 to vector<9x144xf32>
    %73 = arith.addf %71, %72 : vector<9x144xf32>
    %cst_52 = arith.constant 0.0666666701 : f32
    %74 = vector.broadcast %cst_52 : f32 to vector<9x144xf32>
    %75 = arith.mulf %64, %74 : vector<9x144xf32>
    %76 = math.sqrt %75 : vector<9x144xf32>
    %cst_53 = arith.constant 9.99999997E-7 : f32
    %77 = vector.broadcast %cst_53 : f32 to vector<9x144xf32>
    %78 = arith.addf %76, %77 : vector<9x144xf32>
    %cst_54 = arith.constant 1.000000e+00 : f32
    %79 = vector.broadcast %cst_54 : f32 to vector<9x144xf32>
    %80 = arith.divf %79, %73 : vector<9x144xf32>
    %cst_55 = arith.constant 1.000000e+00 : f32
    %81 = vector.broadcast %cst_55 : f32 to vector<9x144xf32>
    %82 = arith.divf %81, %78 : vector<9x144xf32>
    %83 = arith.mulf %58, %80 : vector<9x144xf32>
    %84 = arith.mulf %83, %80 : vector<9x144xf32>
    %85 = arith.mulf %64, %82 : vector<9x144xf32>
    %86 = arith.mulf %85, %82 : vector<9x144xf32>
    %87 = arith.addf %84, %86 : vector<9x144xf32>
    %cst_56 = arith.constant 2.000000e+00 : f32
    %88 = vector.broadcast %cst_56 : f32 to vector<9x144xf32>
    %89 = arith.mulf %88, %68 : vector<9x144xf32>
    %90 = arith.mulf %89, %80 : vector<9x144xf32>
    %91 = arith.mulf %90, %82 : vector<9x144xf32>
    %92 = arith.subf %87, %91 : vector<9x144xf32>
    %93 = vector.shape_cast %92 : vector<9x144xf32> to vector<1x9x144xf32>
    %cst_57 = arith.constant dense<0.000000e+00> : vector<1xf32>
    %94 = vector.multi_reduction <add>, %93, %cst_57 [1, 2] : vector<1x9x144xf32> to vector<1xf32>
    %95 = vector.shape_cast %94 : vector<1xf32> to vector<1x1x1xf32>
    %96 = vector.extract %95[0, 0, 0] : f32 from vector<1x1x1xf32>
    %97 = tpu.iota {dimensions = array<i32: 0>} : vector<8x128xi32>
    %c0_i32 = arith.constant 0 : i32
    %98 = vector.broadcast %c0_i32 : i32 to vector<8x128xi32>
    %99 = arith.cmpi eq, %97, %98 : vector<8x128xi32>
    %cst_58 = arith.constant 0.000000e+00 : f32
    %100 = vector.broadcast %14 : f32 to vector<8x128xf32>
    %101 = vector.broadcast %cst_58 : f32 to vector<8x128xf32>
    %102 = arith.select %99, %100, %101 : vector<8x128xi1>, vector<8x128xf32>
    %c1_i32 = arith.constant 1 : i32
    %103 = vector.broadcast %c1_i32 : i32 to vector<8x128xi32>
    %104 = arith.cmpi eq, %97, %103 : vector<8x128xi32>
    %cst_59 = arith.constant 0.000000e+00 : f32
    %105 = vector.broadcast %28 : f32 to vector<8x128xf32>
    %106 = vector.broadcast %cst_59 : f32 to vector<8x128xf32>
    %107 = arith.select %104, %105, %106 : vector<8x128xi1>, vector<8x128xf32>
    %108 = arith.addf %102, %107 : vector<8x128xf32>
    %c2_i32 = arith.constant 2 : i32
    %109 = vector.broadcast %c2_i32 : i32 to vector<8x128xi32>
    %110 = arith.cmpi eq, %97, %109 : vector<8x128xi32>
    %cst_60 = arith.constant 0.000000e+00 : f32
    %111 = vector.broadcast %37 : f32 to vector<8x128xf32>
    %112 = vector.broadcast %cst_60 : f32 to vector<8x128xf32>
    %113 = arith.select %110, %111, %112 : vector<8x128xi1>, vector<8x128xf32>
    %114 = arith.addf %108, %113 : vector<8x128xf32>
    %c3_i32 = arith.constant 3 : i32
    %115 = vector.broadcast %c3_i32 : i32 to vector<8x128xi32>
    %116 = arith.cmpi eq, %97, %115 : vector<8x128xi32>
    %cst_61 = arith.constant 0.000000e+00 : f32
    %117 = vector.broadcast %96 : f32 to vector<8x128xf32>
    %118 = vector.broadcast %cst_61 : f32 to vector<8x128xf32>
    %119 = arith.select %116, %117, %118 : vector<8x128xi1>, vector<8x128xf32>
    %120 = arith.addf %114, %119 : vector<8x128xf32>
    %c0_62 = arith.constant 0 : index
    %c0_63 = arith.constant 0 : index
    %c0_64 = arith.constant 0 : index
    %121 = vector.load %arg13[%c0_62, %c0_63, %c0_64] : memref<1x8x128xf32, #tpu.memory_space<vmem>>, vector<1x8x128xf32>
    %122 = vector.shape_cast %121 : vector<1x8x128xf32> to vector<8x128xf32>
    %123 = vector.shape_cast %120 : vector<8x128xf32> to vector<1x8x128xf32>
    tpu.vector_store %arg13[%c0_62, %c0_63, %c0_64], %123 {strides = array<i32>} : memref<1x8x128xf32, #tpu.memory_space<vmem>>, vector<1x8x128xf32>,
    return
  }
  func.func @transform_0(%arg0: i32) -> (i32, i32, i32) {
    %c0_i32 = arith.constant 0 : i32
    %c0_i32_0 = arith.constant 0 : i32
    %c0_i32_1 = arith.constant 0 : i32
    return %arg0, %c0_i32, %c0_i32_0 : i32, i32, i32
  }
  func.func @transform_1(%arg0: i32) -> (i32, i32, i32) {
    %c0_i32 = arith.constant 0 : i32
    %c0_i32_0 = arith.constant 0 : i32
    %c0_i32_1 = arith.constant 0 : i32
    return %arg0, %c0_i32, %c0_i32_0 : i32, i32, i32
  }
  func.func @transform_2(%arg0: i32) -> (i32, i32) {
    %c0_i32 = arith.constant 0 : i32
    %c0_i32_0 = arith.constant 0 : i32
    %c0_i32_1 = arith.constant 0 : i32
    return %c0_i32, %c0_i32_0 : i32, i32
  }
  func.func @transform_3(%arg0: i32) -> (i32, i32) {
    %c0_i32 = arith.constant 0 : i32
    %c0_i32_0 = arith.constant 0 : i32
    %c0_i32_1 = arith.constant 0 : i32
    return %c0_i32, %c0_i32_0 : i32, i32
  }
  func.func @transform_4(%arg0: i32) -> (i32, i32) {
    %c0_i32 = arith.constant 0 : i32
    %c0_i32_0 = arith.constant 0 : i32
    %c0_i32_1 = arith.constant 0 : i32
    return %c0_i32, %c0_i32_0 : i32, i32
  }
  func.func @transform_5(%arg0: i32) -> (i32, i32) {
    %c0_i32 = arith.constant 0 : i32
    %c0_i32_0 = arith.constant 0 : i32
    %c0_i32_1 = arith.constant 0 : i32
    return %c0_i32, %c0_i32_0 : i32, i32
  }
  func.func @transform_6(%arg0: i32) -> (i32, i32) {
    %c0_i32 = arith.constant 0 : i32
    %c0_i32_0 = arith.constant 0 : i32
    %c0_i32_1 = arith.constant 0 : i32
    return %c0_i32, %c0_i32_0 : i32, i32
  }
  func.func @transform_7(%arg0: i32) -> (i32, i32) {
    %c0_i32 = arith.constant 0 : i32
    %c0_i32_0 = arith.constant 0 : i32
    %c0_i32_1 = arith.constant 0 : i32
    return %c0_i32, %c0_i32_0 : i32, i32
  }
  func.func @transform_8(%arg0: i32) -> (i32, i32) {
    %c0_i32 = arith.constant 0 : i32
    %c0_i32_0 = arith.constant 0 : i32
    %c0_i32_1 = arith.constant 0 : i32
    return %c0_i32, %c0_i32_0 : i32, i32
  }
  func.func @transform_9(%arg0: i32) -> (i32, i32) {
    %c0_i32 = arith.constant 0 : i32
    %c0_i32_0 = arith.constant 0 : i32
    %c0_i32_1 = arith.constant 0 : i32
    return %c0_i32, %c0_i32_0 : i32, i32
  }
  func.func @transform_10(%arg0: i32) -> (i32, i32) {
    %c0_i32 = arith.constant 0 : i32
    %c0_i32_0 = arith.constant 0 : i32
    %c0_i32_1 = arith.constant 0 : i32
    return %c0_i32, %c0_i32_0 : i32, i32
  }
  func.func @transform_11(%arg0: i32) -> (i32, i32) {
    %c0_i32 = arith.constant 0 : i32
    %c0_i32_0 = arith.constant 0 : i32
    %c0_i32_1 = arith.constant 0 : i32
    return %c0_i32, %c0_i32_0 : i32, i32
  }
  func.func @transform_12(%arg0: i32) -> (i32, i32, i32) {
    %c0_i32 = arith.constant 0 : i32
    %c0_i32_0 = arith.constant 0 : i32
    %c0_i32_1 = arith.constant 0 : i32
    return %arg0, %c0_i32, %c0_i32_0 : i32, i32, i32
  }
}

</mosaic_0001>

<llo_original>
// kernel: tpu_custom_call.1
$region0: #{tpu_custom_call.1}
  #allocation0 [shape = 'u32[]', space=smem, size = 0x4, offset = 0x4, fixed_abs, tag = 'smem constant byte address 0x4 - core index']
  #allocation1 [shape = 'u32[144,128]{1,0:T(1,128)}', space=vmem, size = 0x12000, scoped, tag = 'internal scratch']
  %s0 = inlined_call_operand.vmem [shape: f32[2,16,256], index: 0, kind: input, shape index: {}]
  %s1 = inlined_call_operand.hbm [shape: f32[2,16,256], index: 1, kind: input, shape index: {}]
  %s2 = inlined_call_operand.vmem [shape: f32[16,16], index: 2, kind: input, shape index: {}]
  %s3 = inlined_call_operand.vmem [shape: f32[256,256], index: 3, kind: input, shape index: {}]
  %s4 = inlined_call_operand.hbm [shape: f32[8,16], index: 4, kind: input, shape index: {}]
  %s5 = inlined_call_operand.vmem [shape: f32[256,128], index: 5, kind: input, shape index: {}]
  %s6 = inlined_call_operand.vmem [shape: f32[8,8], index: 6, kind: input, shape index: {}]
  %s7 = inlined_call_operand.vmem [shape: f32[128,128], index: 7, kind: input, shape index: {}]
  %s8 = inlined_call_operand.hbm [shape: f32[4,8], index: 8, kind: input, shape index: {}]
  %s9 = inlined_call_operand.vmem [shape: f32[128,64], index: 9, kind: input, shape index: {}]
  %s10 = inlined_call_operand.vmem [shape: f32[9,16], index: 10, kind: input, shape index: {}]
  %s11 = inlined_call_operand.vmem [shape: f32[256,144], index: 11, kind: input, shape index: {}]
  %s12 = inlined_call_operand.hbm [shape: f32[2,8,128], index: 12, kind: output, shape index: {}]
  %s13 = sld [smem:[#allocation0]]
  $region93: #{tpu_custom_call.1} parent=0
    _
  %s15 = ssub.s32 1, %s13
  %s16 = scalar_select 0, %s15, %s13
  $region1: #{tpu_custom_call.1} parent=0
    #allocation2 [shape = 'u8[32768]{0}', space=vmem, size = 0x8000, scoped, tag = 'input window, operand 1']
    #allocation3 [shape = 's32[2]{0}', space=sflag, size = 0x8, scoped, tag = 'scoped memory for tpu_custom_call.1']
    #allocation4 [shape = 's32[2]{0}', space=sflag, size = 0x8, scoped, tag = 'scoped memory for tpu_custom_call.1']
    #allocation5 [shape = 'u8[4096]{0}', space=vmem, size = 0x1000, scoped, tag = 'input window, operand 4, single buffered']
    #allocation6 [shape = 's32[1]{0}', space=sflag, size = 0x4, scoped, tag = 'scoped memory for tpu_custom_call.1']
    #allocation7 [shape = 'u8[2048]{0}', space=vmem, size = 0x800, scoped, tag = 'input window, operand 8, single buffered']
    #allocation8 [shape = 'u8[8192]{0}', space=vmem, size = 0x2000, scoped, tag = 'output window, operand 0']
    %17 = vsyncpa [#allocation3], 0
    %s18 = scalar_lea.sflag [#allocation3], 1
    %19 = vsyncpa %s18, 0
    %20 = vsyncpa [#allocation6], 0
    %21 = vsyncpa [#allocation4], 0
    %s22 = scalar_lea.sflag [#allocation4], 1
    %23 = vsyncpa %s22, 0
    loop: start=0, step=1, limit=4
    $region2: #{tpu_custom_call.1} parent=1 // loop_pre_header
      _
    $region3: #{tpu_custom_call.1} parent=1 // loop_header
      %s25 = sphi 0, %s29
      %p26 = scmp.ge.s32.totalorder %s25, 4
      %s35 = sphi 0, %s37
      %s38 = sphi 0, %s35
      %s39 = sphi 0, %s38
      %s55 = sphi 0, %s39
      %s61 = sphi 0, %s63
      %s64 = sphi 0, %s61
      %s65 = sphi 0, %s64
      %s81 = sphi 0, %s65
      %s85 = sphi 0, %s85
      %s87 = sphi 0, %s85
      %s88 = sphi 0, %s87
      %s102 = sphi 0, %s88
      %s106 = sphi 0, %s106
      %s108 = sphi 0, %s106
      %s109 = sphi 0, %s108
      %s123 = sphi 0, %s109
      %s127 = sphi 0, %s127
      %s129 = sphi 0, %s127
      %s130 = sphi 0, %s129
      %s144 = sphi 0, %s130
      %s148 = sphi 0, %s148
      %s150 = sphi 0, %s148
      %s151 = sphi 0, %s150
      %s165 = sphi 0, %s151
      %s169 = sphi 0, %s169
      %s171 = sphi 0, %s169
      %s172 = sphi 0, %s171
      %s186 = sphi 0, %s172
      %s190 = sphi 0, %s190
      %s192 = sphi 0, %s190
      %s193 = sphi 0, %s192
      %s207 = sphi 0, %s193
      %s211 = sphi 0, %s211
      %s213 = sphi 0, %s211
      %s214 = sphi 0, %s213
      %s228 = sphi 0, %s214
      %s232 = sphi 0, %s232
      %s234 = sphi 0, %s232
      %s235 = sphi 0, %s234
      %s249 = sphi 0, %s235
      %s253 = sphi 0, %s253
      %s255 = sphi 0, %s253
      %s256 = sphi 0, %s255
      %s270 = sphi 0, %s256
      %s274 = sphi 0, %s274
      %s276 = sphi 0, %s274
      %s277 = sphi 0, %s276
      %s291 = sphi 0, %s277
      %s297 = sphi 0, %s299
      %s300 = sphi 0, %s297
      %s301 = sphi 0, %s300
      %s317 = sphi 0, %s301
    $region4: #{tpu_custom_call.1} parent=1 // loop_header_branch
      %28 = sbr.rel (%p26) target = $region8
    $region5: #{tpu_custom_call.1} parent=1 // loop_body
      %s30 = ssub.s32 %s25, 1
      %s31 = ssub.s32 %s25, 2
      %s32 = sadd.s32 %s25, 1
      %s33 = ssub.s32 %s25, %s32
      %p34 = scmp.eq.s32.totalorder %s33, 0
      %s36 = sadd.s32 %s35, 1
      %s37 = scalar_select %p34, %s35, %s36
      %p40 = pneg %p34
      %p41 = scmp.eq.s32.totalorder %s25, 1
      %p42 = por %p40, %p41
      %p43 = scmp.ne.s32.totalorder %s35, %s38
      %p44 = scmp.eq.s32.totalorder %s25, 0
      %p45 = por %p43, %p44
      %p46 = scmp.ne.s32.totalorder %s35, %s38
      %p47 = scmp.eq.s32.totalorder %s30, 1
      %p48 = por %p46, %p47
      %p49 = scmp.ne.s32.totalorder %s38, %s39
      %p50 = scmp.eq.s32.totalorder %s30, 0
      %p51 = por %p49, %p50
      %p52 = scmp.ne.s32.totalorder %s38, %s39
      %p53 = scmp.eq.s32.totalorder %s31, 1
      %p54 = por %p52, %p53
      %p56 = scmp.ne.s32.totalorder %s39, %s55
      %p57 = scmp.eq.s32.totalorder %s31, 0
      %p58 = por %p56, %p57
      %s59 = ssub.s32 %s25, %s32
      %p60 = scmp.eq.s32.totalorder %s59, 0
      %s62 = sadd.s32 %s61, 1
      %s63 = scalar_select %p60, %s61, %s62
      %p66 = pneg %p60
      %p67 = scmp.eq.s32.totalorder %s25, 1
      %p68 = por %p66, %p67
      %p69 = scmp.ne.s32.totalorder %s61, %s64
      %p70 = scmp.eq.s32.totalorder %s25, 0
      %p71 = por %p69, %p70
      %p72 = scmp.ne.s32.totalorder %s61, %s64
      %p73 = scmp.eq.s32.totalorder %s30, 1
      %p74 = por %p72, %p73
      %p75 = scmp.ne.s32.totalorder %s64, %s65
      %p76 = scmp.eq.s32.totalorder %s30, 0
      %p77 = por %p75, %p76
      %p78 = scmp.ne.s32.totalorder %s64, %s65
      %p79 = scmp.eq.s32.totalorder %s31, 1
      %p80 = por %p78, %p79
      %p82 = scmp.ne.s32.totalorder %s65, %s81
      %p83 = scmp.eq.s32.totalorder %s31, 0
      %p84 = por %p82, %p83
      %s86 = sadd.s32 %s85, 1
      %p89 = scmp.eq.s32.totalorder %s25, 1
      %p90 = scmp.ne.s32.totalorder %s85, %s87
      %p91 = scmp.eq.s32.totalorder %s25, 0
      %p92 = por %p90, %p91
      %p93 = scmp.ne.s32.totalorder %s85, %s87
      %p94 = scmp.eq.s32.totalorder %s30, 1
      %p95 = por %p93, %p94
      %p96 = scmp.ne.s32.totalorder %s87, %s88
      %p97 = scmp.eq.s32.totalorder %s30, 0
      %p98 = por %p96, %p97
      %p99 = scmp.ne.s32.totalorder %s87, %s88
      %p100 = scmp.eq.s32.totalorder %s31, 1
      %p101 = por %p99, %p100
      %p103 = scmp.ne.s32.totalorder %s88, %s102
      %p104 = scmp.eq.s32.totalorder %s31, 0
      %p105 = por %p103, %p104
      %s107 = sadd.s32 %s106, 1
      %p110 = scmp.eq.s32.totalorder %s25, 1
      %p111 = scmp.ne.s32.totalorder %s106, %s108
      %p112 = scmp.eq.s32.totalorder %s25, 0
      %p113 = por %p111, %p112
      %p114 = scmp.ne.s32.totalorder %s106, %s108
      %p115 = scmp.eq.s32.totalorder %s30, 1
      %p116 = por %p114, %p115
      %p117 = scmp.ne.s32.totalorder %s108, %s109
      %p118 = scmp.eq.s32.totalorder %s30, 0
      %p119 = por %p117, %p118
      %p120 = scmp.ne.s32.totalorder %s108, %s109
      %p121 = scmp.eq.s32.totalorder %s31, 1
      %p122 = por %p120, %p121
      %p124 = scmp.ne.s32.totalorder %s109, %s123
      %p125 = scmp.eq.s32.totalorder %s31, 0
      %p126 = por %p124, %p125
      %s128 = sadd.s32 %s127, 1
      %p131 = scmp.eq.s32.totalorder %s25, 1
      %p132 = scmp.ne.s32.totalorder %s127, %s129
      %p133 = scmp.eq.s32.totalorder %s25, 0
      %p134 = por %p132, %p133
      %p135 = scmp.ne.s32.totalorder %s127, %s129
      %p136 = scmp.eq.s32.totalorder %s30, 1
      %p137 = por %p135, %p136
      %p138 = scmp.ne.s32.totalorder %s129, %s130
      %p139 = scmp.eq.s32.totalorder %s30, 0
      %p140 = por %p138, %p139
      %p141 = scmp.ne.s32.totalorder %s129, %s130
      %p142 = scmp.eq.s32.totalorder %s31, 1
      %p143 = por %p141, %p142
      %p145 = scmp.ne.s32.totalorder %s130, %s144
      %p146 = scmp.eq.s32.totalorder %s31, 0
      %p147 = por %p145, %p146
      %s149 = sadd.s32 %s148, 1
      %p152 = scmp.eq.s32.totalorder %s25, 1
      %p153 = scmp.ne.s32.totalorder %s148, %s150
      %p154 = scmp.eq.s32.totalorder %s25, 0
      %p155 = por %p153, %p154
      %p156 = scmp.ne.s32.totalorder %s148, %s150
      %p157 = scmp.eq.s32.totalorder %s30, 1
      %p158 = por %p156, %p157
      %p159 = scmp.ne.s32.totalorder %s150, %s151
      %p160 = scmp.eq.s32.totalorder %s30, 0
      %p161 = por %p159, %p160
      %p162 = scmp.ne.s32.totalorder %s150, %s151
      %p163 = scmp.eq.s32.totalorder %s31, 1
      %p164 = por %p162, %p163
      %p166 = scmp.ne.s32.totalorder %s151, %s165
      %p167 = scmp.eq.s32.totalorder %s31, 0
      %p168 = por %p166, %p167
      %s170 = sadd.s32 %s169, 1
      %p173 = scmp.eq.s32.totalorder %s25, 1
      %p174 = scmp.ne.s32.totalorder %s169, %s171
      %p175 = scmp.eq.s32.totalorder %s25, 0
      %p176 = por %p174, %p175
      %p177 = scmp.ne.s32.totalorder %s169, %s171
      %p178 = scmp.eq.s32.totalorder %s30, 1
      %p179 = por %p177, %p178
      %p180 = scmp.ne.s32.totalorder %s171, %s172
      %p181 = scmp.eq.s32.totalorder %s30, 0
      %p182 = por %p180, %p181
      %p183 = scmp.ne.s32.totalorder %s171, %s172
      %p184 = scmp.eq.s32.totalorder %s31, 1
      %p185 = por %p183, %p184
      %p187 = scmp.ne.s32.totalorder %s172, %s186
      %p188 = scmp.eq.s32.totalorder %s31, 0
      %p189 = por %p187, %p188
      %s191 = sadd.s32 %s190, 1
      %p194 = scmp.eq.s32.totalorder %s25, 1
      %p195 = scmp.ne.s32.totalorder %s190, %s192
      %p196 = scmp.eq.s32.totalorder %s25, 0
      %p197 = por %p195, %p196
      %p198 = scmp.ne.s32.totalorder %s190, %s192
      %p199 = scmp.eq.s32.totalorder %s30, 1
      %p200 = por %p198, %p199
      %p201 = scmp.ne.s32.totalorder %s192, %s193
      %p202 = scmp.eq.s32.totalorder %s30, 0
      %p203 = por %p201, %p202
      %p204 = scmp.ne.s32.totalorder %s192, %s193
      %p205 = scmp.eq.s32.totalorder %s31, 1
      %p206 = por %p204, %p205
      %p208 = scmp.ne.s32.totalorder %s193, %s207
      %p209 = scmp.eq.s32.totalorder %s31, 0
      %p210 = por %p208, %p209
      %s212 = sadd.s32 %s211, 1
      %p215 = scmp.eq.s32.totalorder %s25, 1
      %p216 = scmp.ne.s32.totalorder %s211, %s213
      %p217 = scmp.eq.s32.totalorder %s25, 0
      %p218 = por %p216, %p217
      %p219 = scmp.ne.s32.totalorder %s211, %s213
      %p220 = scmp.eq.s32.totalorder %s30, 1
      %p221 = por %p219, %p220
      %p222 = scmp.ne.s32.totalorder %s213, %s214
      %p223 = scmp.eq.s32.totalorder %s30, 0
      %p224 = por %p222, %p223
      %p225 = scmp.ne.s32.totalorder %s213, %s214
      %p226 = scmp.eq.s32.totalorder %s31, 1
      %p227 = por %p225, %p226
      %p229 = scmp.ne.s32.totalorder %s214, %s228
      %p230 = scmp.eq.s32.totalorder %s31, 0
      %p231 = por %p229, %p230
      %s233 = sadd.s32 %s232, 1
      %p236 = scmp.eq.s32.totalorder %s25, 1
      %p237 = scmp.ne.s32.totalorder %s232, %s234
      %p238 = scmp.eq.s32.totalorder %s25, 0
      %p239 = por %p237, %p238
      %p240 = scmp.ne.s32.totalorder %s232, %s234
      %p241 = scmp.eq.s32.totalorder %s30, 1
      %p242 = por %p240, %p241
      %p243 = scmp.ne.s32.totalorder %s234, %s235
      %p244 = scmp.eq.s32.totalorder %s30, 0
      %p245 = por %p243, %p244
      %p246 = scmp.ne.s32.totalorder %s234, %s235
      %p247 = scmp.eq.s32.totalorder %s31, 1
      %p248 = por %p246, %p247
      %p250 = scmp.ne.s32.totalorder %s235, %s249
      %p251 = scmp.eq.s32.totalorder %s31, 0
      %p252 = por %p250, %p251
      %s254 = sadd.s32 %s253, 1
      %p257 = scmp.eq.s32.totalorder %s25, 1
      %p258 = scmp.ne.s32.totalorder %s253, %s255
      %p259 = scmp.eq.s32.totalorder %s25, 0
      %p260 = por %p258, %p259
      %p261 = scmp.ne.s32.totalorder %s253, %s255
      %p262 = scmp.eq.s32.totalorder %s30, 1
      %p263 = por %p261, %p262
      %p264 = scmp.ne.s32.totalorder %s255, %s256
      %p265 = scmp.eq.s32.totalorder %s30, 0
      %p266 = por %p264, %p265
      %p267 = scmp.ne.s32.totalorder %s255, %s256
      %p268 = scmp.eq.s32.totalorder %s31, 1
      %p269 = por %p267, %p268
      %p271 = scmp.ne.s32.totalorder %s256, %s270
      %p272 = scmp.eq.s32.totalorder %s31, 0
      %p273 = por %p271, %p272
      %s275 = sadd.s32 %s274, 1
      %p278 = scmp.eq.s32.totalorder %s25, 1
      %p279 = scmp.ne.s32.totalorder %s274, %s276
      %p280 = scmp.eq.s32.totalorder %s25, 0
      %p281 = por %p279, %p280
      %p282 = scmp.ne.s32.totalorder %s274, %s276
      %p283 = scmp.eq.s32.totalorder %s30, 1
      %p284 = por %p282, %p283
      %p285 = scmp.ne.s32.totalorder %s276, %s277
      %p286 = scmp.eq.s32.totalorder %s30, 0
      %p287 = por %p285, %p286
      %p288 = scmp.ne.s32.totalorder %s276, %s277
      %p289 = scmp.eq.s32.totalorder %s31, 1
      %p290 = por %p288, %p289
      %p292 = scmp.ne.s32.totalorder %s277, %s291
      %p293 = scmp.eq.s32.totalorder %s31, 0
      %p294 = por %p292, %p293
      %s295 = ssub.s32 %s25, %s32
      %p296 = scmp.eq.s32.totalorder %s295, 0
      %s298 = sadd.s32 %s297, 1
      %s299 = scalar_select %p296, %s297, %s298
      %p302 = pneg %p296
      %p303 = scmp.eq.s32.totalorder %s25, 1
      %p304 = por %p302, %p303
      %p305 = scmp.ne.s32.totalorder %s297, %s300
      %p306 = scmp.eq.s32.totalorder %s25, 0
      %p307 = por %p305, %p306
      %p308 = scmp.ne.s32.totalorder %s297, %s300
      %p309 = scmp.eq.s32.totalorder %s30, 1
      %p310 = por %p308, %p309
      %p311 = scmp.ne.s32.totalorder %s300, %s301
      %p312 = scmp.eq.s32.totalorder %s30, 0
      %p313 = por %p311, %p312
      %p314 = scmp.ne.s32.totalorder %s300, %s301
      %p315 = scmp.eq.s32.totalorder %s31, 1
      %p316 = por %p314, %p315
      %p318 = scmp.ne.s32.totalorder %s301, %s317
      %p319 = scmp.eq.s32.totalorder %s31, 0
      %p320 = por %p318, %p319
      %p321 = scmp.le.s32.totalorder 1, %s25
      %p322 = scmp.lt.s32.totalorder %s25, 3
      %p323 = pnand %p321, %p322
      %p324 = pneg %p323
      // Predicated region
      $region9: #{tpu_custom_call.1} parent=5 // pred_check
        _
      $region10: #{tpu_custom_call.1} parent=5 // pred_check_branch
        %326 = sbr.rel (%p323) target = $region12
      $region11: #{tpu_custom_call.1} parent=5 // pred_region
        %s327 = ssub.s32 %s25, 1
        // Predicated region
        $region13: #{tpu_custom_call.1} parent=11 // pred_check
          %p328 = pneg %p98
        $region14: #{tpu_custom_call.1} parent=11 // pred_check_branch
          %330 = sbr.rel (%p328) target = $region16
        $region15: #{tpu_custom_call.1} parent=11 // pred_region
          _
        $region16: #{tpu_custom_call.1} parent=11 // pred_fallthru
          _
        // Predicated region
        $region17: #{tpu_custom_call.1} parent=11 // pred_check
          %p331 = pneg %p119
        $region18: #{tpu_custom_call.1} parent=11 // pred_check_branch
          %333 = sbr.rel (%p331) target = $region20
        $region19: #{tpu_custom_call.1} parent=11 // pred_region
          _
        $region20: #{tpu_custom_call.1} parent=11 // pred_fallthru
          _
        // Predicated region
        $region21: #{tpu_custom_call.1} parent=11 // pred_check
          %p334 = pneg %p140
        $region22: #{tpu_custom_call.1} parent=11 // pred_check_branch
          %336 = sbr.rel (%p334) target = $region24
        $region23: #{tpu_custom_call.1} parent=11 // pred_region
          %s338 = ssub.s32 128, 128
          %339 = vsyncadd [#allocation6], %s338
          %s341 = sshll.u32 [#allocation5], 4
          %s342 = int_to_ptr.vmem [resolvable:$true] %s341
          %344 = dma.hbm_to_vmem [thread:$0]  %s4, 128, %s342, [#allocation6]
        $region24: #{tpu_custom_call.1} parent=11 // pred_fallthru
          _
        // Predicated region
        $region25: #{tpu_custom_call.1} parent=11 // pred_check
          %p345 = pneg %p161
        $region26: #{tpu_custom_call.1} parent=11 // pred_check_branch
          %347 = sbr.rel (%p345) target = $region28
        $region27: #{tpu_custom_call.1} parent=11 // pred_region
          _
        $region28: #{tpu_custom_call.1} parent=11 // pred_fallthru
          _
        // Predicated region
        $region29: #{tpu_custom_call.1} parent=11 // pred_check
          %p348 = pneg %p182
        $region30: #{tpu_custom_call.1} parent=11 // pred_check_branch
          %350 = sbr.rel (%p348) target = $region32
        $region31: #{tpu_custom_call.1} parent=11 // pred_region
          _
        $region32: #{tpu_custom_call.1} parent=11 // pred_fallthru
          _
        // Predicated region
        $region33: #{tpu_custom_call.1} parent=11 // pred_check
          %p351 = pneg %p203
        $region34: #{tpu_custom_call.1} parent=11 // pred_check_branch
          %353 = sbr.rel (%p351) target = $region36
        $region35: #{tpu_custom_call.1} parent=11 // pred_region
          _
        $region36: #{tpu_custom_call.1} parent=11 // pred_fallthru
          _
        // Predicated region
        $region37: #{tpu_custom_call.1} parent=11 // pred_check
          %p354 = pneg %p224
        $region38: #{tpu_custom_call.1} parent=11 // pred_check_branch
          %356 = sbr.rel (%p354) target = $region40
        $region39: #{tpu_custom_call.1} parent=11 // pred_region
          %s358 = ssub.s32 64, 64
          %359 = vsyncadd [#allocation6], %s358
          %s361 = sshll.u32 [#allocation7], 4
          %s362 = int_to_ptr.vmem [resolvable:$true] %s361
          %364 = dma.hbm_to_vmem [thread:$0]  %s8, 64, %s362, [#allocation6]
        $region40: #{tpu_custom_call.1} parent=11 // pred_fallthru
          _
        // Predicated region
        $region41: #{tpu_custom_call.1} parent=11 // pred_check
          %p365 = pneg %p245
        $region42: #{tpu_custom_call.1} parent=11 // pred_check_branch
          %367 = sbr.rel (%p365) target = $region44
        $region43: #{tpu_custom_call.1} parent=11 // pred_region
          _
        $region44: #{tpu_custom_call.1} parent=11 // pred_fallthru
          _
        // Predicated region
        $region45: #{tpu_custom_call.1} parent=11 // pred_check
          %p368 = pneg %p266
        $region46: #{tpu_custom_call.1} parent=11 // pred_check_branch
          %370 = sbr.rel (%p368) target = $region48
        $region47: #{tpu_custom_call.1} parent=11 // pred_region
          _
        $region48: #{tpu_custom_call.1} parent=11 // pred_fallthru
          _
        // Predicated region
        $region49: #{tpu_custom_call.1} parent=11 // pred_check
          %p371 = pneg %p287
        $region50: #{tpu_custom_call.1} parent=11 // pred_check_branch
          %373 = sbr.rel (%p371) target = $region52
        $region51: #{tpu_custom_call.1} parent=11 // pred_region
          _
        $region52: #{tpu_custom_call.1} parent=11 // pred_fallthru
          _
      $region12: #{tpu_custom_call.1} parent=5 // pred_fallthru
        _
      %p374 = scmp.lt.s32.totalorder %s25, 2
      // Predicated region
      $region53: #{tpu_custom_call.1} parent=5 // pred_check
        %p375 = pneg %p374
      $region54: #{tpu_custom_call.1} parent=5 // pred_check_branch
        %377 = sbr.rel (%p375) target = $region56
      $region55: #{tpu_custom_call.1} parent=5 // pred_region
        // Predicated region
        $region57: #{tpu_custom_call.1} parent=55 // pred_check
          %p378 = pneg %p45
        $region58: #{tpu_custom_call.1} parent=55 // pred_check_branch
          %380 = sbr.rel (%p378) target = $region60
        $region59: #{tpu_custom_call.1} parent=55 // pred_region
          %p381 = scmp.lt.s32.totalorder %s25, 1
          %s382 = scalar_select %p381, %s25, 1
          %s383 = smul.addr %s382, 4
          %s384 = smul.addr %s383, 8
          %s385 = scalar_lea.vmem %s0, %s384
        $region60: #{tpu_custom_call.1} parent=55 // pred_fallthru
          _
        // Predicated region
        $region61: #{tpu_custom_call.1} parent=55 // pred_check
          %p386 = pneg %p71
        $region62: #{tpu_custom_call.1} parent=55 // pred_check_branch
          %388 = sbr.rel (%p386) target = $region64
        $region63: #{tpu_custom_call.1} parent=55 // pred_region
          %s389 = sand.u32 %s61, 1
          %s390 = scalar_lea.sflag [#allocation3], %s389
          %s391 = sand.u32 %s61, 1
          %s392 = smul.addr %s391, 32
          %s393 = scalar_lea.vmem [#allocation2], %s392
          %s395 = ssub.s32 512, 512
          %396 = vsyncadd %s390, %s395
          %s397 = smul.addr %s25, 4
          %s398 = smul.addr %s397, 128
          %s399 = scalar_lea.hbm %s1, %s398
          %s400 = sshll.u32 %s393, 4
          %s401 = int_to_ptr.vmem [resolvable:$true] %s400
          %406 = dma.hbm_to_vmem [thread:$0]  %s399, 512, %s401, %s390, 256, 256, 16
        $region64: #{tpu_custom_call.1} parent=55 // pred_fallthru
          _
      $region56: #{tpu_custom_call.1} parent=5 // pred_fallthru
        _
      %p407 = scmp.le.s32.totalorder 1, %s25
      %p408 = scmp.lt.s32.totalorder %s25, 3
      %p409 = pnand %p407, %p408
      %p410 = pneg %p409
      // Predicated region
      $region65: #{tpu_custom_call.1} parent=5 // pred_check
        _
      $region66: #{tpu_custom_call.1} parent=5 // pred_check_branch
        %412 = sbr.rel (%p409) target = $region68
      $region67: #{tpu_custom_call.1} parent=5 // pred_region
        %s413 = ssub.s32 %s25, 1
        %s414 = sand.u32 %s64, 1
        %s415 = scalar_lea.sflag [#allocation3], %s414
        %s416 = sand.u32 %s64, 1
        %s417 = smul.addr %s416, 32
        %s418 = scalar_lea.vmem [#allocation2], %s417
        // Predicated region
        $region69: #{tpu_custom_call.1} parent=67 // pred_check
          %p419 = pneg %p77
        $region70: #{tpu_custom_call.1} parent=67 // pred_check_branch
          %421 = sbr.rel (%p419) target = $region72
        $region71: #{tpu_custom_call.1} parent=67 // pred_region
          %422 = dma.done %s415, 512
        $region72: #{tpu_custom_call.1} parent=67 // pred_fallthru
          _
        // Predicated region
        $region73: #{tpu_custom_call.1} parent=67 // pred_check
          %p423 = pneg %p140
        $region74: #{tpu_custom_call.1} parent=67 // pred_check_branch
          %425 = sbr.rel (%p423) target = $region76
        $region75: #{tpu_custom_call.1} parent=67 // pred_region
          %426 = dma.done [#allocation6], 128
        $region76: #{tpu_custom_call.1} parent=67 // pred_fallthru
          _
        // Predicated region
        $region77: #{tpu_custom_call.1} parent=67 // pred_check
          %p427 = pneg %p224
        $region78: #{tpu_custom_call.1} parent=67 // pred_check_branch
          %429 = sbr.rel (%p427) target = $region80
        $region79: #{tpu_custom_call.1} parent=67 // pred_region
          %430 = dma.done [#allocation6], 64
        $region80: #{tpu_custom_call.1} parent=67 // pred_fallthru
          _
        %p431 = scmp.lt.s32.totalorder %s30, 1
        %s432 = scalar_select %p431, %s30, 1
        %s433 = smul.addr %s432, 4
        %s434 = smul.addr %s433, 8
        %s435 = scalar_lea.vmem %s0, %s434
        %p436 = pneg %p51
        %p437 = pneg %p48
        %s438 = sand.u32 %s64, 1
        %s439 = scalar_lea.sflag [#allocation3], %s438
        %s440 = sand.u32 %s64, 1
        %s441 = smul.addr %s440, 32
        %s442 = scalar_lea.vmem [#allocation2], %s441
        %p443 = pneg %p77
        %p444 = pneg %p74
        %p445 = pneg %p98
        %p446 = pneg %p95
        %p447 = pneg %p119
        %p448 = pneg %p116
        %p449 = pneg %p140
        %p450 = pneg %p137
        %p451 = pneg %p161
        %p452 = pneg %p158
        %p453 = pneg %p182
        %p454 = pneg %p179
        %p455 = pneg %p203
        %p456 = pneg %p200
        %p457 = pneg %p224
        %p458 = pneg %p221
        %p459 = pneg %p245
        %p460 = pneg %p242
        %p461 = pneg %p266
        %p462 = pneg %p263
        %p463 = pneg %p287
        %p464 = pneg %p284
        %p465 = pneg %p313
        %p466 = pneg %p310
        %s467 = sand.u32 %s300, 1
        %s468 = scalar_lea.sflag [#allocation4], %s467
        %s469 = sand.u32 %s300, 1
        %s470 = smul.addr %s469, 8
        %s471 = scalar_lea.vmem [#allocation8], %s470
        %p472 = scmp.lt.s32.totalorder %s30, 1
        %s473 = scalar_select %p472, %s30, 1
        %s474 = smul.addr %s473, 4
        %s475 = smul.addr %s474, 8
        %s476 = scalar_lea.vmem %s0, %s475
        %v477 = vld [vmem:[%s476] sm:$0xff]
        %v478 = vld [vmem:[%s476 + $0x8] sm:$0xff]
        %v479 = vld [vmem:[%s476 + $0x10] sm:$0xff]
        %v480 = vld [vmem:[%s476 + $0x18] sm:$0xff]
        %v481 = vld [vmem:[%s418] sm:$0xff]
        %v482 = vld [vmem:[%s418 + $0x8] sm:$0xff]
        %v483 = vld [vmem:[%s418 + $0x10] sm:$0xff]
        %v484 = vld [vmem:[%s418 + $0x18] sm:$0xff]
        %v485 = vsub.f32 %v477, %v481
        %v486 = vsub.f32 %v478, %v482
        %v487 = vsub.f32 %v479, %v483
        %v488 = vsub.f32 %v480, %v484
        %v489 = vld [vmem:[%s2] sm:$0xff]
        %v490 = vld [vmem:[%s2 + $0x8] sm:$0xff]
        %v491 = vld [vmem:[%s3] sm:$0xff]
        %v492 = vld [vmem:[%s3 + $0x8] sm:$0xff]
        %v493 = vld [vmem:[%s3 + $0x10] sm:$0xff]
        %v494 = vld [vmem:[%s3 + $0x18] sm:$0xff]
        %v495 = vld [vmem:[%s3 + $0x20] sm:$0xff]
        %v496 = vld [vmem:[%s3 + $0x28] sm:$0xff]
        %v497 = vld [vmem:[%s3 + $0x30] sm:$0xff]
        %v498 = vld [vmem:[%s3 + $0x38] sm:$0xff]
        %v499 = vld [vmem:[%s3 + $0x40] sm:$0xff]
        %v500 = vld [vmem:[%s3 + $0x48] sm:$0xff]
        %v501 = vld [vmem:[%s3 + $0x50] sm:$0xff]
        %v502 = vld [vmem:[%s3 + $0x58] sm:$0xff]
        %v503 = vld [vmem:[%s3 + $0x60] sm:$0xff]
        %v504 = vld [vmem:[%s3 + $0x68] sm:$0xff]
        %v505 = vld [vmem:[%s3 + $0x70] sm:$0xff]
        %v506 = vld [vmem:[%s3 + $0x78] sm:$0xff]
        %v507 = vld [vmem:[%s3 + $0x80] sm:$0xff]
        %v508 = vld [vmem:[%s3 + $0x88] sm:$0xff]
        %v509 = vld [vmem:[%s3 + $0x90] sm:$0xff]
        %v510 = vld [vmem:[%s3 + $0x98] sm:$0xff]
        %v511 = vld [vmem:[%s3 + $0xa0] sm:$0xff]
        %v512 = vld [vmem:[%s3 + $0xa8] sm:$0xff]
        %v513 = vld [vmem:[%s3 + $0xb0] sm:$0xff]
        %v514 = vld [vmem:[%s3 + $0xb8] sm:$0xff]
        %v515 = vld [vmem:[%s3 + $0xc0] sm:$0xff]
        %v516 = vld [vmem:[%s3 + $0xc8] sm:$0xff]
        %v517 = vld [vmem:[%s3 + $0xd0] sm:$0xff]
        %v518 = vld [vmem:[%s3 + $0xd8] sm:$0xff]
        %v519 = vld [vmem:[%s3 + $0xe0] sm:$0xff]
        %v520 = vld [vmem:[%s3 + $0xe8] sm:$0xff]
        %v521 = vld [vmem:[%s3 + $0xf0] sm:$0xff]
        %v522 = vld [vmem:[%s3 + $0xf8] sm:$0xff]
        %v523 = vld [vmem:[%s3 + $0x100] sm:$0xff]
        %v524 = vld [vmem:[%s3 + $0x108] sm:$0xff]
        %v525 = vld [vmem:[%s3 + $0x110] sm:$0xff]
        %v526 = vld [vmem:[%s3 + $0x118] sm:$0xff]
        %v527 = vld [vmem:[%s3 + $0x120] sm:$0xff]
        %v528 = vld [vmem:[%s3 + $0x128] sm:$0xff]
        %v529 = vld [vmem:[%s3 + $0x130] sm:$0xff]
        %v530 = vld [vmem:[%s3 + $0x138] sm:$0xff]
        %v531 = vld [vmem:[%s3 + $0x140] sm:$0xff]
        %v532 = vld [vmem:[%s3 + $0x148] sm:$0xff]
        %v533 = vld [vmem:[%s3 + $0x150] sm:$0xff]
        %v534 = vld [vmem:[%s3 + $0x158] sm:$0xff]
        %v535 = vld [vmem:[%s3 + $0x160] sm:$0xff]
        %v536 = vld [vmem:[%s3 + $0x168] sm:$0xff]
        %v537 = vld [vmem:[%s3 + $0x170] sm:$0xff]
        %v538 = vld [vmem:[%s3 + $0x178] sm:$0xff]
        %v539 = vld [vmem:[%s3 + $0x180] sm:$0xff]
        %v540 = vld [vmem:[%s3 + $0x188] sm:$0xff]
        %v541 = vld [vmem:[%s3 + $0x190] sm:$0xff]
        %v542 = vld [vmem:[%s3 + $0x198] sm:$0xff]
        %v543 = vld [vmem:[%s3 + $0x1a0] sm:$0xff]
        %v544 = vld [vmem:[%s3 + $0x1a8] sm:$0xff]
        %v545 = vld [vmem:[%s3 + $0x1b0] sm:$0xff]
        %v546 = vld [vmem:[%s3 + $0x1b8] sm:$0xff]
        %v547 = vld [vmem:[%s3 + $0x1c0] sm:$0xff]
        %v548 = vld [vmem:[%s3 + $0x1c8] sm:$0xff]
        %v549 = vld [vmem:[%s3 + $0x1d0] sm:$0xff]
        %v550 = vld [vmem:[%s3 + $0x1d8] sm:$0xff]
        %v551 = vld [vmem:[%s3 + $0x1e0] sm:$0xff]
        %v552 = vld [vmem:[%s3 + $0x1e8] sm:$0xff]
        %v553 = vld [vmem:[%s3 + $0x1f0] sm:$0xff]
        %v554 = vld [vmem:[%s3 + $0x1f8] sm:$0xff]
        %555 = vmatprep.subr.mxu0 %v522
        %556 = vmatpush1.msra.mxu0 %v521
        %557 = vmatprep.subr.mxu0 %v520
        %558 = vmatpush1.msra.mxu0 %v519
        %559 = vmatprep.subr.mxu0 %v518
        %560 = vmatpush1.msra.mxu0 %v517
        %561 = vmatprep.subr.mxu0 %v516
        %562 = vmatpush1.msra.mxu0 %v515
        %563 = vmatprep.subr.mxu0 %v514
        %564 = vmatpush1.msra.mxu0 %v513
        %565 = vmatprep.subr.mxu0 %v512
        %566 = vmatpush1.msra.mxu0 %v511
        %567 = vmatprep.subr.mxu0 %v510
        %568 = vmatpush1.msra.mxu0 %v509
        %569 = vmatprep.subr.mxu0 %v508
        %570 = vmatpush1.msra.mxu0 %v507
        %571 = vmatprep.subr.mxu0 %v506
        %572 = vmatpush1.msra.mxu0 %v505
        %573 = vmatprep.subr.mxu0 %v504
        %574 = vmatpush1.msra.mxu0 %v503
        %575 = vmatprep.subr.mxu0 %v502
        %576 = vmatpush1.msra.mxu0 %v501
        %577 = vmatprep.subr.mxu0 %v500
        %578 = vmatpush1.msra.mxu0 %v499
        %579 = vmatprep.subr.mxu0 %v498
        %580 = vmatpush1.msra.mxu0 %v497
        %581 = vmatprep.subr.mxu0 %v496
        %582 = vmatpush1.msra.mxu0 %v495
        %583 = vmatprep.subr.mxu0 %v494
        %584 = vmatpush1.msra.mxu0 %v493
        %585 = vmatprep.subr.mxu0 %v492
        %586 = vmatpush1.msra.mxu0 %v491
        %587 = vmatprep.subr.mxu0 %v554
        %588 = vmatpush2.msra.mxu0 %v553
        %589 = vmatprep.subr.mxu0 %v552
        %590 = vmatpush2.msra.mxu0 %v551
        %591 = vmatprep.subr.mxu0 %v550
        %592 = vmatpush2.msra.mxu0 %v549
        %593 = vmatprep.subr.mxu0 %v548
        %594 = vmatpush2.msra.mxu0 %v547
        %595 = vmatprep.subr.mxu0 %v546
        %596 = vmatpush2.msra.mxu0 %v545
        %597 = vmatprep.subr.mxu0 %v544
        %598 = vmatpush2.msra.mxu0 %v543
        %599 = vmatprep.subr.mxu0 %v542
        %600 = vmatpush2.msra.mxu0 %v541
        %601 = vmatprep.subr.mxu0 %v540
        %602 = vmatpush2.msra.mxu0 %v539
        %603 = vmatprep.subr.mxu0 %v538
        %604 = vmatpush2.msra.mxu0 %v537
        %605 = vmatprep.subr.mxu0 %v536
        %606 = vmatpush2.msra.mxu0 %v535
        %607 = vmatprep.subr.mxu0 %v534
        %608 = vmatpush2.msra.mxu0 %v533
        %609 = vmatprep.subr.mxu0 %v532
        %610 = vmatpush2.msra.mxu0 %v531
        %611 = vmatprep.subr.mxu0 %v530
        %612 = vmatpush2.msra.mxu0 %v529
        %613 = vmatprep.subr.mxu0 %v528
        %614 = vmatpush2.msra.mxu0 %v527
        %615 = vmatprep.subr.mxu0 %v526
        %616 = vmatpush2.msra.mxu0 %v525
        %617 = vmatprep.subr.mxu0 %v524
        %618 = vmatpush2.msra.mxu0 %v523
        %619 = vmatprep.mubr.f32.mxu0 %v486
        %620 = vmatmul.mubr.f32.gmra.mxu0 %v485
        %v621 = vpop.f32.mrf.mxu0
        %v622 = vadd.f32 0.0, %v621
        %v623 = vpop.f32.mrf.mxu0
        %v624 = vadd.f32 0.0, %v623
        %625 = vmatprep.mubr.f32.mxu0 %v488
        %626 = vmatmul.mubr.f32.gmra.mxu0 %v487
        %v627 = vpop.f32.mrf.mxu0
        %v628 = vadd.f32 0.0, %v627
        %v629 = vpop.f32.mrf.mxu0
        %v630 = vadd.f32 0.0, %v629
        %631 = vdwg.mxu0
        %vm632 = vcmask 130048
        %v634 = vsel %vm632, %v489, 0
        %v637 = vsel %vm632, %v490, 0
        %639 = vmatprep.subr.mxu0 0.0
        %640 = vmatpush1.msra.mxu0 0.0
        %641 = vmatprep.subr.mxu0 0.0
        %642 = vmatpush1.msra.mxu0 0.0
        %643 = vmatprep.subr.mxu0 0.0
        %644 = vmatpush1.msra.mxu0 0.0
        %645 = vmatprep.subr.mxu0 0.0
        %646 = vmatpush1.msra.mxu0 0.0
        %647 = vmatprep.subr.mxu0 0.0
        %648 = vmatpush1.msra.mxu0 0.0
        %649 = vmatprep.subr.mxu0 0.0
        %650 = vmatpush1.msra.mxu0 0.0
        %651 = vmatprep.subr.mxu0 0.0
        %652 = vmatpush1.msra.mxu0 0.0
        %653 = vmatprep.subr.mxu0 0.0
        %654 = vmatpush1.msra.mxu0 0.0
        %655 = vmatprep.subr.mxu0 0.0
        %656 = vmatpush1.msra.mxu0 0.0
        %657 = vmatprep.subr.mxu0 0.0
        %658 = vmatpush1.msra.mxu0 0.0
        %659 = vmatprep.subr.mxu0 0.0
        %660 = vmatpush1.msra.mxu0 0.0
        %661 = vmatprep.subr.mxu0 0.0
        %662 = vmatpush1.msra.mxu0 0.0
        %663 = vmatprep.subr.mxu0 0.0
        %664 = vmatpush1.msra.mxu0 0.0
        %665 = vmatprep.subr.mxu0 0.0
        %666 = vmatpush1.msra.mxu0 0.0
        %667 = vmatprep.subr.mxu0 %v630
        %668 = vmatpush1.msra.mxu0 %v628
        %669 = vmatprep.subr.mxu0 %v624
        %670 = vmatpush1.msra.mxu0 %v622
        %671 = vmatprep.subr.mxu0 0.0
        %672 = vmatpush2.msra.mxu0 0.0
        %673 = vmatprep.subr.mxu0 0.0
        %674 = vmatpush2.msra.mxu0 0.0
        %675 = vmatprep.subr.mxu0 0.0
        %676 = vmatpush2.msra.mxu0 0.0
        %677 = vmatprep.subr.mxu0 0.0
        %678 = vmatpush2.msra.mxu0 0.0
        %679 = vmatprep.subr.mxu0 0.0
        %680 = vmatpush2.msra.mxu0 0.0
        %681 = vmatprep.subr.mxu0 0.0
        %682 = vmatpush2.msra.mxu0 0.0
        %683 = vmatprep.subr.mxu0 0.0
        %684 = vmatpush2.msra.mxu0 0.0
        %685 = vmatprep.subr.mxu0 0.0
        %686 = vmatpush2.msra.mxu0 0.0
        %687 = vmatprep.subr.mxu0 0.0
        %688 = vmatpush2.msra.mxu0 0.0
        %689 = vmatprep.subr.mxu0 0.0
        %690 = vmatpush2.msra.mxu0 0.0
        %691 = vmatprep.subr.mxu0 0.0
        %692 = vmatpush2.msra.mxu0 0.0
        %693 = vmatprep.subr.mxu0 0.0
        %694 = vmatpush2.msra.mxu0 0.0
        %695 = vmatprep.subr.mxu0 0.0
        %696 = vmatpush2.msra.mxu0 0.0
        %697 = vmatprep.subr.mxu0 0.0
        %698 = vmatpush2.msra.mxu0 0.0
        %699 = vmatprep.subr.mxu0 0.0
        %700 = vmatpush2.msra.mxu0 0.0
        %701 = vmatprep.subr.mxu0 0.0
        %702 = vmatpush2.msra.mxu0 0.0
        %703 = vmatprep.mubr.f32.mxu0 0.0
        %704 = vmatmul.mubr.f32.gmra.mxu0 %v634
        %v705 = vpop.f32.mrf.mxu0
        %v706 = vadd.f32 0.0, %v705
        %v707 = vpop.f32.mrf.mxu0
        %v708 = vadd.f32 0.0, %v707
        %709 = vmatprep.mubr.f32.mxu0 0.0
        %710 = vmatmul.mubr.f32.gmra.mxu0 %v637
        %v711 = vpop.f32.mrf.mxu0
        %v712 = vadd.f32 0.0, %v711
        %v713 = vpop.f32.mrf.mxu0
        %v714 = vadd.f32 0.0, %v713
        %715 = vdwg.mxu0
        %v716 = vsub.f32 %v485, %v706
        %v717 = vsub.f32 %v486, %v708
        %v718 = vsub.f32 %v487, %v712
        %v719 = vsub.f32 %v488, %v714
        %v720 = vmul.f32 %v716, %v716
        %v721 = vmul.f32 %v717, %v717
        %v722 = vmul.f32 %v718, %v718
        %v723 = vmul.f32 %v719, %v719
        %v724 = vadd.f32 %v720, %v721
        %v725 = vadd.f32 %v724, %v722
        %v726 = vadd.f32 %v725, %v723
        %727 = vadd.xlane.f32.xlu0 %v726
        %v728 = vpop.xlane.xlu0 %727
        %v729 = vrot.slane %v728, 4
        %v730 = vadd.f32 %v728, %v729
        %v731 = vrot.slane %v730, 2
        %v732 = vadd.f32 %v730, %v731
        %v733 = vrot.slane %v732, 1
        %v734 = vadd.f32 %v732, %v733
        %s735 = vtos %v734
        %v736 = vld [vmem:[#allocation5] sm:$0xff]
        %v737 = vld [vmem:[%s5] sm:$0xff]
        %v738 = vld [vmem:[%s5 + $0x8] sm:$0xff]
        %v739 = vld [vmem:[%s5 + $0x10] sm:$0xff]
        %v740 = vld [vmem:[%s5 + $0x18] sm:$0xff]
        %v741 = vld [vmem:[%s5 + $0x20] sm:$0xff]
        %v742 = vld [vmem:[%s5 + $0x28] sm:$0xff]
        %v743 = vld [vmem:[%s5 + $0x30] sm:$0xff]
        %v744 = vld [vmem:[%s5 + $0x38] sm:$0xff]
        %v745 = vld [vmem:[%s5 + $0x40] sm:$0xff]
        %v746 = vld [vmem:[%s5 + $0x48] sm:$0xff]
        %v747 = vld [vmem:[%s5 + $0x50] sm:$0xff]
        %v748 = vld [vmem:[%s5 + $0x58] sm:$0xff]
        %v749 = vld [vmem:[%s5 + $0x60] sm:$0xff]
        %v750 = vld [vmem:[%s5 + $0x68] sm:$0xff]
        %v751 = vld [vmem:[%s5 + $0x70] sm:$0xff]
        %v752 = vld [vmem:[%s5 + $0x78] sm:$0xff]
        %v753 = vld [vmem:[%s5 + $0x80] sm:$0xff]
        %v754 = vld [vmem:[%s5 + $0x88] sm:$0xff]
        %v755 = vld [vmem:[%s5 + $0x90] sm:$0xff]
        %v756 = vld [vmem:[%s5 + $0x98] sm:$0xff]
        %v757 = vld [vmem:[%s5 + $0xa0] sm:$0xff]
        %v758 = vld [vmem:[%s5 + $0xa8] sm:$0xff]
        %v759 = vld [vmem:[%s5 + $0xb0] sm:$0xff]
        %v760 = vld [vmem:[%s5 + $0xb8] sm:$0xff]
        %v761 = vld [vmem:[%s5 + $0xc0] sm:$0xff]
        %v762 = vld [vmem:[%s5 + $0xc8] sm:$0xff]
        %v763 = vld [vmem:[%s5 + $0xd0] sm:$0xff]
        %v764 = vld [vmem:[%s5 + $0xd8] sm:$0xff]
        %v765 = vld [vmem:[%s5 + $0xe0] sm:$0xff]
        %v766 = vld [vmem:[%s5 + $0xe8] sm:$0xff]
        %v767 = vld [vmem:[%s5 + $0xf0] sm:$0xff]
        %v768 = vld [vmem:[%s5 + $0xf8] sm:$0xff]
        %769 = vmatprep.subr.mxu0 0.0
        %770 = vmatpush1.msra.mxu0 %v752
        %771 = vmatprep.subr.mxu0 0.0
        %772 = vmatpush1.msra.mxu0 %v751
        %773 = vmatprep.subr.mxu0 0.0
        %774 = vmatpush1.msra.mxu0 %v750
        %775 = vmatprep.subr.mxu0 0.0
        %776 = vmatpush1.msra.mxu0 %v749
        %777 = vmatprep.subr.mxu0 0.0
        %778 = vmatpush1.msra.mxu0 %v748
        %779 = vmatprep.subr.mxu0 0.0
        %780 = vmatpush1.msra.mxu0 %v747
        %781 = vmatprep.subr.mxu0 0.0
        %782 = vmatpush1.msra.mxu0 %v746
        %783 = vmatprep.subr.mxu0 0.0
        %784 = vmatpush1.msra.mxu0 %v745
        %785 = vmatprep.subr.mxu0 0.0
        %786 = vmatpush1.msra.mxu0 %v744
        %787 = vmatprep.subr.mxu0 0.0
        %788 = vmatpush1.msra.mxu0 %v743
        %789 = vmatprep.subr.mxu0 0.0
        %790 = vmatpush1.msra.mxu0 %v742
        %791 = vmatprep.subr.mxu0 0.0
        %792 = vmatpush1.msra.mxu0 %v741
        %793 = vmatprep.subr.mxu0 0.0
        %794 = vmatpush1.msra.mxu0 %v740
        %795 = vmatprep.subr.mxu0 0.0
        %796 = vmatpush1.msra.mxu0 %v739
        %797 = vmatprep.subr.mxu0 0.0
        %798 = vmatpush1.msra.mxu0 %v738
        %799 = vmatprep.subr.mxu0 0.0
        %800 = vmatpush1.msra.mxu0 %v737
        %801 = vmatprep.subr.mxu0 0.0
        %802 = vmatpush2.msra.mxu0 %v768
        %803 = vmatprep.subr.mxu0 0.0
        %804 = vmatpush2.msra.mxu0 %v767
        %805 = vmatprep.subr.mxu0 0.0
        %806 = vmatpush2.msra.mxu0 %v766
        %807 = vmatprep.subr.mxu0 0.0
        %808 = vmatpush2.msra.mxu0 %v765
        %809 = vmatprep.subr.mxu0 0.0
        %810 = vmatpush2.msra.mxu0 %v764
        %811 = vmatprep.subr.mxu0 0.0
        %812 = vmatpush2.msra.mxu0 %v763
        %813 = vmatprep.subr.mxu0 0.0
        %814 = vmatpush2.msra.mxu0 %v762
        %815 = vmatprep.subr.mxu0 0.0
        %816 = vmatpush2.msra.mxu0 %v761
        %817 = vmatprep.subr.mxu0 0.0
        %818 = vmatpush2.msra.mxu0 %v760
        %819 = vmatprep.subr.mxu0 0.0
        %820 = vmatpush2.msra.mxu0 %v759
        %821 = vmatprep.subr.mxu0 0.0
        %822 = vmatpush2.msra.mxu0 %v758
        %823 = vmatprep.subr.mxu0 0.0
        %824 = vmatpush2.msra.mxu0 %v757
        %825 = vmatprep.subr.mxu0 0.0
        %826 = vmatpush2.msra.mxu0 %v756
        %827 = vmatprep.subr.mxu0 0.0
        %828 = vmatpush2.msra.mxu0 %v755
        %829 = vmatprep.subr.mxu0 0.0
        %830 = vmatpush2.msra.mxu0 %v754
        %831 = vmatprep.subr.mxu0 0.0
        %832 = vmatpush2.msra.mxu0 %v753
        %833 = vmatprep.mubr.f32.mxu0 %v708
        %834 = vmatmul.mubr.f32.gmra.mxu0 %v706
        %v835 = vpop.f32.mrf.mxu0
        %v836 = vadd.f32 0.0, %v835
        %v837 = vpop.f32.mrf.mxu0
        %838 = vmatprep.mubr.f32.mxu0 %v714
        %839 = vmatmul.mubr.f32.gmra.mxu0 %v712
        %v840 = vpop.f32.mrf.mxu0
        %v841 = vadd.f32 0.0, %v840
        %v842 = vpop.f32.mrf.mxu0
        %843 = vdwg.mxu0
        %v845 = vsel %vm632, %v736, 0
        %847 = vmatprep.subr.mxu0 0.0
        %848 = vmatpush1.msra.mxu0 0.0
        %849 = vmatprep.subr.mxu0 0.0
        %850 = vmatpush1.msra.mxu0 0.0
        %851 = vmatprep.subr.mxu0 0.0
        %852 = vmatpush1.msra.mxu0 0.0
        %853 = vmatprep.subr.mxu0 0.0
        %854 = vmatpush1.msra.mxu0 0.0
        %855 = vmatprep.subr.mxu0 0.0
        %856 = vmatpush1.msra.mxu0 0.0
        %857 = vmatprep.subr.mxu0 0.0
        %858 = vmatpush1.msra.mxu0 0.0
        %859 = vmatprep.subr.mxu0 0.0
        %860 = vmatpush1.msra.mxu0 0.0
        %861 = vmatprep.subr.mxu0 0.0
        %862 = vmatpush1.msra.mxu0 0.0
        %863 = vmatprep.subr.mxu0 0.0
        %864 = vmatpush1.msra.mxu0 0.0
        %865 = vmatprep.subr.mxu0 0.0
        %866 = vmatpush1.msra.mxu0 0.0
        %867 = vmatprep.subr.mxu0 0.0
        %868 = vmatpush1.msra.mxu0 0.0
        %869 = vmatprep.subr.mxu0 0.0
        %870 = vmatpush1.msra.mxu0 0.0
        %871 = vmatprep.subr.mxu0 0.0
        %872 = vmatpush1.msra.mxu0 0.0
        %873 = vmatprep.subr.mxu0 0.0
        %874 = vmatpush1.msra.mxu0 0.0
        %875 = vmatprep.subr.mxu0 0.0
        %876 = vmatpush1.msra.mxu0 %v841
        %877 = vmatprep.subr.mxu0 0.0
        %878 = vmatpush1.msra.mxu0 %v836
        %879 = vmatprep.subr.mxu0 0.0
        %880 = vmatpush2.msra.mxu0 0.0
        %881 = vmatprep.subr.mxu0 0.0
        %882 = vmatpush2.msra.mxu0 0.0
        %883 = vmatprep.subr.mxu0 0.0
        %884 = vmatpush2.msra.mxu0 0.0
        %885 = vmatprep.subr.mxu0 0.0
        %886 = vmatpush2.msra.mxu0 0.0
        %887 = vmatprep.subr.mxu0 0.0
        %888 = vmatpush2.msra.mxu0 0.0
        %889 = vmatprep.subr.mxu0 0.0
        %890 = vmatpush2.msra.mxu0 0.0
        %891 = vmatprep.subr.mxu0 0.0
        %892 = vmatpush2.msra.mxu0 0.0
        %893 = vmatprep.subr.mxu0 0.0
        %894 = vmatpush2.msra.mxu0 0.0
        %895 = vmatprep.subr.mxu0 0.0
        %896 = vmatpush2.msra.mxu0 0.0
        %897 = vmatprep.subr.mxu0 0.0
        %898 = vmatpush2.msra.mxu0 0.0
        %899 = vmatprep.subr.mxu0 0.0
        %900 = vmatpush2.msra.mxu0 0.0
        %901 = vmatprep.subr.mxu0 0.0
        %902 = vmatpush2.msra.mxu0 0.0
        %903 = vmatprep.subr.mxu0 0.0
        %904 = vmatpush2.msra.mxu0 0.0
        %905 = vmatprep.subr.mxu0 0.0
        %906 = vmatpush2.msra.mxu0 0.0
        %907 = vmatprep.subr.mxu0 0.0
        %908 = vmatpush2.msra.mxu0 0.0
        %909 = vmatprep.subr.mxu0 0.0
        %910 = vmatpush2.msra.mxu0 0.0
        %911 = vmatprep.mubr.f32.mxu0 0.0
        %912 = vmatmul.mubr.f32.gmra.mxu0 %v845
        %v913 = vpop.f32.mrf.mxu0
        %v914 = vadd.f32 0.0, %v913
        %v915 = vpop.f32.mrf.mxu0
        %916 = vdwg.mxu0
        %v917 = vld [vmem:[%s6] sm:$0xff]
        %v918 = vld [vmem:[%s7] sm:$0xff]
        %v919 = vld [vmem:[%s7 + $0x8] sm:$0xff]
        %v920 = vld [vmem:[%s7 + $0x10] sm:$0xff]
        %v921 = vld [vmem:[%s7 + $0x18] sm:$0xff]
        %v922 = vld [vmem:[%s7 + $0x20] sm:$0xff]
        %v923 = vld [vmem:[%s7 + $0x28] sm:$0xff]
        %v924 = vld [vmem:[%s7 + $0x30] sm:$0xff]
        %v925 = vld [vmem:[%s7 + $0x38] sm:$0xff]
        %v926 = vld [vmem:[%s7 + $0x40] sm:$0xff]
        %v927 = vld [vmem:[%s7 + $0x48] sm:$0xff]
        %v928 = vld [vmem:[%s7 + $0x50] sm:$0xff]
        %v929 = vld [vmem:[%s7 + $0x58] sm:$0xff]
        %v930 = vld [vmem:[%s7 + $0x60] sm:$0xff]
        %v931 = vld [vmem:[%s7 + $0x68] sm:$0xff]
        %v932 = vld [vmem:[%s7 + $0x70] sm:$0xff]
        %v933 = vld [vmem:[%s7 + $0x78] sm:$0xff]
        %934 = vmatprep.subr.mxu0 0.0
        %935 = vmatpush1.msra.mxu0 %v933
        %936 = vmatprep.subr.mxu0 0.0
        %937 = vmatpush1.msra.mxu0 %v932
        %938 = vmatprep.subr.mxu0 0.0
        %939 = vmatpush1.msra.mxu0 %v931
        %940 = vmatprep.subr.mxu0 0.0
        %941 = vmatpush1.msra.mxu0 %v930
        %942 = vmatprep.subr.mxu0 0.0
        %943 = vmatpush1.msra.mxu0 %v929
        %944 = vmatprep.subr.mxu0 0.0
        %945 = vmatpush1.msra.mxu0 %v928
        %946 = vmatprep.subr.mxu0 0.0
        %947 = vmatpush1.msra.mxu0 %v927
        %948 = vmatprep.subr.mxu0 0.0
        %949 = vmatpush1.msra.mxu0 %v926
        %950 = vmatprep.subr.mxu0 0.0
        %951 = vmatpush1.msra.mxu0 %v925
        %952 = vmatprep.subr.mxu0 0.0
        %953 = vmatpush1.msra.mxu0 %v924
        %954 = vmatprep.subr.mxu0 0.0
        %955 = vmatpush1.msra.mxu0 %v923
        %956 = vmatprep.subr.mxu0 0.0
        %957 = vmatpush1.msra.mxu0 %v922
        %958 = vmatprep.subr.mxu0 0.0
        %959 = vmatpush1.msra.mxu0 %v921
        %960 = vmatprep.subr.mxu0 0.0
        %961 = vmatpush1.msra.mxu0 %v920
        %962 = vmatprep.subr.mxu0 0.0
        %963 = vmatpush1.msra.mxu0 %v919
        %964 = vmatprep.subr.mxu0 0.0
        %965 = vmatpush1.msra.mxu0 %v918
        %966 = vmatprep.subr.mxu0 0.0
        %967 = vmatpush2.msra.mxu0 0.0
        %968 = vmatprep.subr.mxu0 0.0
        %969 = vmatpush2.msra.mxu0 0.0
        %970 = vmatprep.subr.mxu0 0.0
        %971 = vmatpush2.msra.mxu0 0.0
        %972 = vmatprep.subr.mxu0 0.0
        %973 = vmatpush2.msra.mxu0 0.0
        %974 = vmatprep.subr.mxu0 0.0
        %975 = vmatpush2.msra.mxu0 0.0
        %976 = vmatprep.subr.mxu0 0.0
        %977 = vmatpush2.msra.mxu0 0.0
        %978 = vmatprep.subr.mxu0 0.0
        %979 = vmatpush2.msra.mxu0 0.0
        %980 = vmatprep.subr.mxu0 0.0
        %981 = vmatpush2.msra.mxu0 0.0
        %982 = vmatprep.subr.mxu0 0.0
        %983 = vmatpush2.msra.mxu0 0.0
        %984 = vmatprep.subr.mxu0 0.0
        %985 = vmatpush2.msra.mxu0 0.0
        %986 = vmatprep.subr.mxu0 0.0
        %987 = vmatpush2.msra.mxu0 0.0
        %988 = vmatprep.subr.mxu0 0.0
        %989 = vmatpush2.msra.mxu0 0.0
        %990 = vmatprep.subr.mxu0 0.0
        %991 = vmatpush2.msra.mxu0 0.0
        %992 = vmatprep.subr.mxu0 0.0
        %993 = vmatpush2.msra.mxu0 0.0
        %994 = vmatprep.subr.mxu0 0.0
        %995 = vmatpush2.msra.mxu0 0.0
        %996 = vmatprep.subr.mxu0 0.0
        %997 = vmatpush2.msra.mxu0 0.0
        %998 = vmatprep.mubr.f32.mxu0 0.0
        %999 = vmatmul.mubr.f32.gmra.mxu0 %v914
        %v1000 = vpop.f32.mrf.mxu0
        %v1001 = vadd.f32 0.0, %v1000
        %v1002 = vpop.f32.mrf.mxu0
        %1003 = vdwg.mxu0
        %vm1004 = vcmask 64512
        %v1006 = vsel %vm1004, %v917, 0
        %1008 = vmatprep.subr.mxu0 0.0
        %1009 = vmatpush1.msra.mxu0 0.0
        %1010 = vmatprep.subr.mxu0 0.0
        %1011 = vmatpush1.msra.mxu0 0.0
        %1012 = vmatprep.subr.mxu0 0.0
        %1013 = vmatpush1.msra.mxu0 0.0
        %1014 = vmatprep.subr.mxu0 0.0
        %1015 = vmatpush1.msra.mxu0 0.0
        %1016 = vmatprep.subr.mxu0 0.0
        %1017 = vmatpush1.msra.mxu0 0.0
        %1018 = vmatprep.subr.mxu0 0.0
        %1019 = vmatpush1.msra.mxu0 0.0
        %1020 = vmatprep.subr.mxu0 0.0
        %1021 = vmatpush1.msra.mxu0 0.0
        %1022 = vmatprep.subr.mxu0 0.0
        %1023 = vmatpush1.msra.mxu0 0.0
        %1024 = vmatprep.subr.mxu0 0.0
        %1025 = vmatpush1.msra.mxu0 0.0
        %1026 = vmatprep.subr.mxu0 0.0
        %1027 = vmatpush1.msra.mxu0 0.0
        %1028 = vmatprep.subr.mxu0 0.0
        %1029 = vmatpush1.msra.mxu0 0.0
        %1030 = vmatprep.subr.mxu0 0.0
        %1031 = vmatpush1.msra.mxu0 0.0
        %1032 = vmatprep.subr.mxu0 0.0
        %1033 = vmatpush1.msra.mxu0 0.0
        %1034 = vmatprep.subr.mxu0 0.0
        %1035 = vmatpush1.msra.mxu0 0.0
        %1036 = vmatprep.subr.mxu0 0.0
        %1037 = vmatpush1.msra.mxu0 0.0
        %1038 = vmatprep.subr.mxu0 0.0
        %1039 = vmatpush1.msra.mxu0 %v1001
        %1040 = vmatprep.subr.mxu0 0.0
        %1041 = vmatpush2.msra.mxu0 0.0
        %1042 = vmatprep.subr.mxu0 0.0
        %1043 = vmatpush2.msra.mxu0 0.0
        %1044 = vmatprep.subr.mxu0 0.0
        %1045 = vmatpush2.msra.mxu0 0.0
        %1046 = vmatprep.subr.mxu0 0.0
        %1047 = vmatpush2.msra.mxu0 0.0
        %1048 = vmatprep.subr.mxu0 0.0
        %1049 = vmatpush2.msra.mxu0 0.0
        %1050 = vmatprep.subr.mxu0 0.0
        %1051 = vmatpush2.msra.mxu0 0.0
        %1052 = vmatprep.subr.mxu0 0.0
        %1053 = vmatpush2.msra.mxu0 0.0
        %1054 = vmatprep.subr.mxu0 0.0
        %1055 = vmatpush2.msra.mxu0 0.0
        %1056 = vmatprep.subr.mxu0 0.0
        %1057 = vmatpush2.msra.mxu0 0.0
        %1058 = vmatprep.subr.mxu0 0.0
        %1059 = vmatpush2.msra.mxu0 0.0
        %1060 = vmatprep.subr.mxu0 0.0
        %1061 = vmatpush2.msra.mxu0 0.0
        %1062 = vmatprep.subr.mxu0 0.0
        %1063 = vmatpush2.msra.mxu0 0.0
        %1064 = vmatprep.subr.mxu0 0.0
        %1065 = vmatpush2.msra.mxu0 0.0
        %1066 = vmatprep.subr.mxu0 0.0
        %1067 = vmatpush2.msra.mxu0 0.0
        %1068 = vmatprep.subr.mxu0 0.0
        %1069 = vmatpush2.msra.mxu0 0.0
        %1070 = vmatprep.subr.mxu0 0.0
        %1071 = vmatpush2.msra.mxu0 0.0
        %1072 = vmatprep.mubr.f32.mxu0 0.0
        %1073 = vmatmul.mubr.f32.gmra.mxu0 %v1006
        %v1074 = vpop.f32.mrf.mxu0
        %v1075 = vadd.f32 0.0, %v1074
        %v1076 = vpop.f32.mrf.mxu0
        %1077 = vdwg.mxu0
        %v1078 = vsub.f32 %v914, %v1075
        %v1079 = vmul.f32 %v1078, %v1078
        %1080 = vadd.xlane.f32.xlu0 %v1079
        %v1081 = vpop.xlane.xlu0 %1080
        %v1082 = vrot.slane %v1081, 4
        %v1083 = vadd.f32 %v1081, %v1082
        %v1084 = vrot.slane %v1083, 2
        %v1085 = vadd.f32 %v1083, %v1084
        %v1086 = vrot.slane %v1085, 1
        %v1087 = vadd.f32 %v1085, %v1086
        %s1088 = vtos %v1087
        %v1089 = vld [vmem:[#allocation7] sm:$0xf]
        %v1090 = vld [vmem:[%s9] sm:$0xff]
        %v1091 = vld [vmem:[%s9 + $0x8] sm:$0xff]
        %v1092 = vld [vmem:[%s9 + $0x10] sm:$0xff]
        %v1093 = vld [vmem:[%s9 + $0x18] sm:$0xff]
        %v1094 = vld [vmem:[%s9 + $0x20] sm:$0xff]
        %v1095 = vld [vmem:[%s9 + $0x28] sm:$0xff]
        %v1096 = vld [vmem:[%s9 + $0x30] sm:$0xff]
        %v1097 = vld [vmem:[%s9 + $0x38] sm:$0xff]
        %v1098 = vld [vmem:[%s9 + $0x40] sm:$0xff]
        %v1099 = vld [vmem:[%s9 + $0x48] sm:$0xff]
        %v1100 = vld [vmem:[%s9 + $0x50] sm:$0xff]
        %v1101 = vld [vmem:[%s9 + $0x58] sm:$0xff]
        %v1102 = vld [vmem:[%s9 + $0x60] sm:$0xff]
        %v1103 = vld [vmem:[%s9 + $0x68] sm:$0xff]
        %v1104 = vld [vmem:[%s9 + $0x70] sm:$0xff]
        %v1105 = vld [vmem:[%s9 + $0x78] sm:$0xff]
        %1106 = vmatprep.subr.mxu0 0.0
        %1107 = vmatpush1.msra.mxu0 %v1105
        %1108 = vmatprep.subr.mxu0 0.0
        %1109 = vmatpush1.msra.mxu0 %v1104
        %1110 = vmatprep.subr.mxu0 0.0
        %1111 = vmatpush1.msra.mxu0 %v1103
        %1112 = vmatprep.subr.mxu0 0.0
        %1113 = vmatpush1.msra.mxu0 %v1102
        %1114 = vmatprep.subr.mxu0 0.0
        %1115 = vmatpush1.msra.mxu0 %v1101
        %1116 = vmatprep.subr.mxu0 0.0
        %1117 = vmatpush1.msra.mxu0 %v1100
        %1118 = vmatprep.subr.mxu0 0.0
        %1119 = vmatpush1.msra.mxu0 %v1099
        %1120 = vmatprep.subr.mxu0 0.0
        %1121 = vmatpush1.msra.mxu0 %v1098
        %1122 = vmatprep.subr.mxu0 0.0
        %1123 = vmatpush1.msra.mxu0 %v1097
        %1124 = vmatprep.subr.mxu0 0.0
        %1125 = vmatpush1.msra.mxu0 %v1096
        %1126 = vmatprep.subr.mxu0 0.0
        %1127 = vmatpush1.msra.mxu0 %v1095
        %1128 = vmatprep.subr.mxu0 0.0
        %1129 = vmatpush1.msra.mxu0 %v1094
        %1130 = vmatprep.subr.mxu0 0.0
        %1131 = vmatpush1.msra.mxu0 %v1093
        %1132 = vmatprep.subr.mxu0 0.0
        %1133 = vmatpush1.msra.mxu0 %v1092
        %1134 = vmatprep.subr.mxu0 0.0
        %1135 = vmatpush1.msra.mxu0 %v1091
        %1136 = vmatprep.subr.mxu0 0.0
        %1137 = vmatpush1.msra.mxu0 %v1090
        %1138 = vmatprep.subr.mxu0 0.0
        %1139 = vmatpush2.msra.mxu0 0.0
        %1140 = vmatprep.subr.mxu0 0.0
        %1141 = vmatpush2.msra.mxu0 0.0
        %1142 = vmatprep.subr.mxu0 0.0
        %1143 = vmatpush2.msra.mxu0 0.0
        %1144 = vmatprep.subr.mxu0 0.0
        %1145 = vmatpush2.msra.mxu0 0.0
        %1146 = vmatprep.subr.mxu0 0.0
        %1147 = vmatpush2.msra.mxu0 0.0
        %1148 = vmatprep.subr.mxu0 0.0
        %1149 = vmatpush2.msra.mxu0 0.0
        %1150 = vmatprep.subr.mxu0 0.0
        %1151 = vmatpush2.msra.mxu0 0.0
        %1152 = vmatprep.subr.mxu0 0.0
        %1153 = vmatpush2.msra.mxu0 0.0
        %1154 = vmatprep.subr.mxu0 0.0
        %1155 = vmatpush2.msra.mxu0 0.0
        %1156 = vmatprep.subr.mxu0 0.0
        %1157 = vmatpush2.msra.mxu0 0.0
        %1158 = vmatprep.subr.mxu0 0.0
        %1159 = vmatpush2.msra.mxu0 0.0
        %1160 = vmatprep.subr.mxu0 0.0
        %1161 = vmatpush2.msra.mxu0 0.0
        %1162 = vmatprep.subr.mxu0 0.0
        %1163 = vmatpush2.msra.mxu0 0.0
        %1164 = vmatprep.subr.mxu0 0.0
        %1165 = vmatpush2.msra.mxu0 0.0
        %1166 = vmatprep.subr.mxu0 0.0
        %1167 = vmatpush2.msra.mxu0 0.0
        %1168 = vmatprep.subr.mxu0 0.0
        %1169 = vmatpush2.msra.mxu0 0.0
        %1170 = vmatprep.mubr.f32.mxu0 0.0
        %1171 = vmatmul.mubr.f32.gmra.mxu0 %v1075
        %v1172 = vpop.f32.mrf.mxu0
        %v1173 = vadd.f32 0.0, %v1172
        %v1174 = vpop.f32.mrf.mxu0
        %1175 = vdwg.mxu0
        %v1177 = vsel %vm1004, %v1089, 0
        %1179 = vmatprep.subr.mxu0 0.0
        %1180 = vmatpush1.msra.mxu0 0.0
        %1181 = vmatprep.subr.mxu0 0.0
        %1182 = vmatpush1.msra.mxu0 0.0
        %1183 = vmatprep.subr.mxu0 0.0
        %1184 = vmatpush1.msra.mxu0 0.0
        %1185 = vmatprep.subr.mxu0 0.0
        %1186 = vmatpush1.msra.mxu0 0.0
        %1187 = vmatprep.subr.mxu0 0.0
        %1188 = vmatpush1.msra.mxu0 0.0
        %1189 = vmatprep.subr.mxu0 0.0
        %1190 = vmatpush1.msra.mxu0 0.0
        %1191 = vmatprep.subr.mxu0 0.0
        %1192 = vmatpush1.msra.mxu0 0.0
        %1193 = vmatprep.subr.mxu0 0.0
        %1194 = vmatpush1.msra.mxu0 0.0
        %1195 = vmatprep.subr.mxu0 0.0
        %1196 = vmatpush1.msra.mxu0 0.0
        %1197 = vmatprep.subr.mxu0 0.0
        %1198 = vmatpush1.msra.mxu0 0.0
        %1199 = vmatprep.subr.mxu0 0.0
        %1200 = vmatpush1.msra.mxu0 0.0
        %1201 = vmatprep.subr.mxu0 0.0
        %1202 = vmatpush1.msra.mxu0 0.0
        %1203 = vmatprep.subr.mxu0 0.0
        %1204 = vmatpush1.msra.mxu0 0.0
        %1205 = vmatprep.subr.mxu0 0.0
        %1206 = vmatpush1.msra.mxu0 0.0
        %1207 = vmatprep.subr.mxu0 0.0
        %1208 = vmatpush1.msra.mxu0 0.0
        %1209 = vmatprep.subr.mxu0 0.0
        %1210 = vmatpush1.msra.mxu0 %v1173
        %1211 = vmatprep.subr.mxu0 0.0
        %1212 = vmatpush2.msra.mxu0 0.0
        %1213 = vmatprep.subr.mxu0 0.0
        %1214 = vmatpush2.msra.mxu0 0.0
        %1215 = vmatprep.subr.mxu0 0.0
        %1216 = vmatpush2.msra.mxu0 0.0
        %1217 = vmatprep.subr.mxu0 0.0
        %1218 = vmatpush2.msra.mxu0 0.0
        %1219 = vmatprep.subr.mxu0 0.0
        %1220 = vmatpush2.msra.mxu0 0.0
        %1221 = vmatprep.subr.mxu0 0.0
        %1222 = vmatpush2.msra.mxu0 0.0
        %1223 = vmatprep.subr.mxu0 0.0
        %1224 = vmatpush2.msra.mxu0 0.0
        %1225 = vmatprep.subr.mxu0 0.0
        %1226 = vmatpush2.msra.mxu0 0.0
        %1227 = vmatprep.subr.mxu0 0.0
        %1228 = vmatpush2.msra.mxu0 0.0
        %1229 = vmatprep.subr.mxu0 0.0
        %1230 = vmatpush2.msra.mxu0 0.0
        %1231 = vmatprep.subr.mxu0 0.0
        %1232 = vmatpush2.msra.mxu0 0.0
        %1233 = vmatprep.subr.mxu0 0.0
        %1234 = vmatpush2.msra.mxu0 0.0
        %1235 = vmatprep.subr.mxu0 0.0
        %1236 = vmatpush2.msra.mxu0 0.0
        %1237 = vmatprep.subr.mxu0 0.0
        %1238 = vmatpush2.msra.mxu0 0.0
        %1239 = vmatprep.subr.mxu0 0.0
        %1240 = vmatpush2.msra.mxu0 0.0
        %1241 = vmatprep.subr.mxu0 0.0
        %1242 = vmatpush2.msra.mxu0 0.0
        %1243 = vmatprep.mubr.f32.mxu0 0.0
        %1244 = vmatmul.mubr.f32.gmra.mxu0 %v1177
        %v1245 = vpop.f32.mrf.mxu0
        %v1246 = vadd.f32 0.0, %v1245
        %v1247 = vpop.f32.mrf.mxu0
        %1248 = vdwg.mxu0
        %v1249 = vmul.f32 %v1246, %v1246
        %vm1250 = vcmask 519168
        %v1251 = vsel %vm1250, %v1249, 0.0
        %1252 = vadd.xlane.f32.xlu0 %v1251
        %v1253 = vpop.xlane.xlu0 %1252
        %v1254 = vrot.slane %v1253, 4
        %v1255 = vadd.f32 %v1253, %v1254
        %v1256 = vrot.slane %v1255, 2
        %v1257 = vadd.f32 %v1255, %v1256
        %v1258 = vrot.slane %v1257, 1
        %v1259 = vadd.f32 %v1257, %v1258
        %s1260 = vtos %v1259
        %v1261 = vld [vmem:[%s10] sm:$0xff]
        %v1262 = vld [vmem:[%s10 + $0x8] sm:$0x1]
        %v1263 = vld [vmem:[%s11] sm:$0xff]
        %v1264 = vld [vmem:[%s11 + $0x8] sm:$0xff]
        %v1265 = vld [vmem:[%s11 + $0x10] sm:$0xff]
        %v1266 = vld [vmem:[%s11 + $0x18] sm:$0xff]
        %v1267 = vld [vmem:[%s11 + $0x20] sm:$0xff]
        %v1268 = vld [vmem:[%s11 + $0x28] sm:$0xff]
        %v1269 = vld [vmem:[%s11 + $0x30] sm:$0xff]
        %v1270 = vld [vmem:[%s11 + $0x38] sm:$0xff]
        %v1271 = vld [vmem:[%s11 + $0x40] sm:$0xff]
        %v1272 = vld [vmem:[%s11 + $0x48] sm:$0xff]
        %v1273 = vld [vmem:[%s11 + $0x50] sm:$0xff]
        %v1274 = vld [vmem:[%s11 + $0x58] sm:$0xff]
        %v1275 = vld [vmem:[%s11 + $0x60] sm:$0xff]
        %v1276 = vld [vmem:[%s11 + $0x68] sm:$0xff]
        %v1277 = vld [vmem:[%s11 + $0x70] sm:$0xff]
        %v1278 = vld [vmem:[%s11 + $0x78] sm:$0xff]
        %v1279 = vld [vmem:[%s11 + $0x80] sm:$0xff]
        %v1280 = vld [vmem:[%s11 + $0x88] sm:$0xff]
        %v1281 = vld [vmem:[%s11 + $0x90] sm:$0xff]
        %v1282 = vld [vmem:[%s11 + $0x98] sm:$0xff]
        %v1283 = vld [vmem:[%s11 + $0xa0] sm:$0xff]
        %v1284 = vld [vmem:[%s11 + $0xa8] sm:$0xff]
        %v1285 = vld [vmem:[%s11 + $0xb0] sm:$0xff]
        %v1286 = vld [vmem:[%s11 + $0xb8] sm:$0xff]
        %v1287 = vld [vmem:[%s11 + $0xc0] sm:$0xff]
        %v1288 = vld [vmem:[%s11 + $0xc8] sm:$0xff]
        %v1289 = vld [vmem:[%s11 + $0xd0] sm:$0xff]
        %v1290 = vld [vmem:[%s11 + $0xd8] sm:$0xff]
        %v1291 = vld [vmem:[%s11 + $0xe0] sm:$0xff]
        %v1292 = vld [vmem:[%s11 + $0xe8] sm:$0xff]
        %v1293 = vld [vmem:[%s11 + $0xf0] sm:$0xff]
        %v1294 = vld [vmem:[%s11 + $0xf8] sm:$0xff]
        %v1295 = vld [vmem:[%s11 + $0x100] sm:$0xff]
        %v1296 = vld [vmem:[%s11 + $0x108] sm:$0xff]
        %v1297 = vld [vmem:[%s11 + $0x110] sm:$0xff]
        %v1298 = vld [vmem:[%s11 + $0x118] sm:$0xff]
        %v1299 = vld [vmem:[%s11 + $0x120] sm:$0xff]
        %v1300 = vld [vmem:[%s11 + $0x128] sm:$0xff]
        %v1301 = vld [vmem:[%s11 + $0x130] sm:$0xff]
        %v1302 = vld [vmem:[%s11 + $0x138] sm:$0xff]
        %v1303 = vld [vmem:[%s11 + $0x140] sm:$0xff]
        %v1304 = vld [vmem:[%s11 + $0x148] sm:$0xff]
        %v1305 = vld [vmem:[%s11 + $0x150] sm:$0xff]
        %v1306 = vld [vmem:[%s11 + $0x158] sm:$0xff]
        %v1307 = vld [vmem:[%s11 + $0x160] sm:$0xff]
        %v1308 = vld [vmem:[%s11 + $0x168] sm:$0xff]
        %v1309 = vld [vmem:[%s11 + $0x170] sm:$0xff]
        %v1310 = vld [vmem:[%s11 + $0x178] sm:$0xff]
        %v1311 = vld [vmem:[%s11 + $0x180] sm:$0xff]
        %v1312 = vld [vmem:[%s11 + $0x188] sm:$0xff]
        %v1313 = vld [vmem:[%s11 + $0x190] sm:$0xff]
        %v1314 = vld [vmem:[%s11 + $0x198] sm:$0xff]
        %v1315 = vld [vmem:[%s11 + $0x1a0] sm:$0xff]
        %v1316 = vld [vmem:[%s11 + $0x1a8] sm:$0xff]
        %v1317 = vld [vmem:[%s11 + $0x1b0] sm:$0xff]
        %v1318 = vld [vmem:[%s11 + $0x1b8] sm:$0xff]
        %v1319 = vld [vmem:[%s11 + $0x1c0] sm:$0xff]
        %v1320 = vld [vmem:[%s11 + $0x1c8] sm:$0xff]
        %v1321 = vld [vmem:[%s11 + $0x1d0] sm:$0xff]
        %v1322 = vld [vmem:[%s11 + $0x1d8] sm:$0xff]
        %v1323 = vld [vmem:[%s11 + $0x1e0] sm:$0xff]
        %v1324 = vld [vmem:[%s11 + $0x1e8] sm:$0xff]
        %v1325 = vld [vmem:[%s11 + $0x1f0] sm:$0xff]
        %v1326 = vld [vmem:[%s11 + $0x1f8] sm:$0xff]
        %1327 = vmatprep.subr.mxu0 %v1294
        %1328 = vmatpush1.msra.mxu0 %v1293
        %1329 = vmatprep.subr.mxu0 %v1292
        %1330 = vmatpush1.msra.mxu0 %v1291
        %1331 = vmatprep.subr.mxu0 %v1290
        %1332 = vmatpush1.msra.mxu0 %v1289
        %1333 = vmatprep.subr.mxu0 %v1288
        %1334 = vmatpush1.msra.mxu0 %v1287
        %1335 = vmatprep.subr.mxu0 %v1286
        %1336 = vmatpush1.msra.mxu0 %v1285
        %1337 = vmatprep.subr.mxu0 %v1284
        %1338 = vmatpush1.msra.mxu0 %v1283
        %1339 = vmatprep.subr.mxu0 %v1282
        %1340 = vmatpush1.msra.mxu0 %v1281
        %1341 = vmatprep.subr.mxu0 %v1280
        %1342 = vmatpush1.msra.mxu0 %v1279
        %1343 = vmatprep.subr.mxu0 %v1278
        %1344 = vmatpush1.msra.mxu0 %v1277
        %1345 = vmatprep.subr.mxu0 %v1276
        %1346 = vmatpush1.msra.mxu0 %v1275
        %1347 = vmatprep.subr.mxu0 %v1274
        %1348 = vmatpush1.msra.mxu0 %v1273
        %1349 = vmatprep.subr.mxu0 %v1272
        %1350 = vmatpush1.msra.mxu0 %v1271
        %1351 = vmatprep.subr.mxu0 %v1270
        %1352 = vmatpush1.msra.mxu0 %v1269
        %1353 = vmatprep.subr.mxu0 %v1268
        %1354 = vmatpush1.msra.mxu0 %v1267
        %1355 = vmatprep.subr.mxu0 %v1266
        %1356 = vmatpush1.msra.mxu0 %v1265
        %1357 = vmatprep.subr.mxu0 %v1264
        %1358 = vmatpush1.msra.mxu0 %v1263
        %1359 = vmatprep.subr.mxu0 %v1326
        %1360 = vmatpush2.msra.mxu0 %v1325
        %1361 = vmatprep.subr.mxu0 %v1324
        %1362 = vmatpush2.msra.mxu0 %v1323
        %1363 = vmatprep.subr.mxu0 %v1322
        %1364 = vmatpush2.msra.mxu0 %v1321
        %1365 = vmatprep.subr.mxu0 %v1320
        %1366 = vmatpush2.msra.mxu0 %v1319
        %1367 = vmatprep.subr.mxu0 %v1318
        %1368 = vmatpush2.msra.mxu0 %v1317
        %1369 = vmatprep.subr.mxu0 %v1316
        %1370 = vmatpush2.msra.mxu0 %v1315
        %1371 = vmatprep.subr.mxu0 %v1314
        %1372 = vmatpush2.msra.mxu0 %v1313
        %1373 = vmatprep.subr.mxu0 %v1312
        %1374 = vmatpush2.msra.mxu0 %v1311
        %1375 = vmatprep.subr.mxu0 %v1310
        %1376 = vmatpush2.msra.mxu0 %v1309
        %1377 = vmatprep.subr.mxu0 %v1308
        %1378 = vmatpush2.msra.mxu0 %v1307
        %1379 = vmatprep.subr.mxu0 %v1306
        %1380 = vmatpush2.msra.mxu0 %v1305
        %1381 = vmatprep.subr.mxu0 %v1304
        %1382 = vmatpush2.msra.mxu0 %v1303
        %1383 = vmatprep.subr.mxu0 %v1302
        %1384 = vmatpush2.msra.mxu0 %v1301
        %1385 = vmatprep.subr.mxu0 %v1300
        %1386 = vmatpush2.msra.mxu0 %v1299
        %1387 = vmatprep.subr.mxu0 %v1298
        %1388 = vmatpush2.msra.mxu0 %v1297
        %1389 = vmatprep.subr.mxu0 %v1296
        %1390 = vmatpush2.msra.mxu0 %v1295
        %1391 = vmatprep.mubr.f32.mxu0 %v478
        %1392 = vmatmul.mubr.f32.gmra.mxu0 %v477
        %v1393 = vpop.f32.mrf.mxu0
        %v1394 = vadd.f32 0.0, %v1393
        %v1395 = vpop.f32.mrf.mxu0
        %v1396 = vadd.f32 0.0, %v1395
        %1397 = vmatprep.mubr.f32.mxu0 %v480
        %1398 = vmatmul.mubr.f32.gmra.mxu0 %v479
        %v1399 = vpop.f32.mrf.mxu0
        %v1400 = vadd.f32 0.0, %v1399
        %v1401 = vpop.f32.mrf.mxu0
        %v1402 = vadd.f32 0.0, %v1401
        %1403 = vdwg.mxu0
        %v1405 = vsel %vm632, %v1261, 0
        %v1408 = vsel %vm632, %v1262, 0
        %1410 = vmatprep.subr.mxu0 0.0
        %1411 = vmatpush1.msra.mxu0 0.0
        %1412 = vmatprep.subr.mxu0 0.0
        %1413 = vmatpush1.msra.mxu0 0.0
        %1414 = vmatprep.subr.mxu0 0.0
        %1415 = vmatpush1.msra.mxu0 0.0
        %1416 = vmatprep.subr.mxu0 0.0
        %1417 = vmatpush1.msra.mxu0 0.0
        %1418 = vmatprep.subr.mxu0 0.0
        %1419 = vmatpush1.msra.mxu0 0.0
        %1420 = vmatprep.subr.mxu0 0.0
        %1421 = vmatpush1.msra.mxu0 0.0
        %1422 = vmatprep.subr.mxu0 0.0
        %1423 = vmatpush1.msra.mxu0 0.0
        %1424 = vmatprep.subr.mxu0 0.0
        %1425 = vmatpush1.msra.mxu0 0.0
        %1426 = vmatprep.subr.mxu0 0.0
        %1427 = vmatpush1.msra.mxu0 0.0
        %1428 = vmatprep.subr.mxu0 0.0
        %1429 = vmatpush1.msra.mxu0 0.0
        %1430 = vmatprep.subr.mxu0 0.0
        %1431 = vmatpush1.msra.mxu0 0.0
        %1432 = vmatprep.subr.mxu0 0.0
        %1433 = vmatpush1.msra.mxu0 0.0
        %1434 = vmatprep.subr.mxu0 0.0
        %1435 = vmatpush1.msra.mxu0 0.0
        %1436 = vmatprep.subr.mxu0 0.0
        %1437 = vmatpush1.msra.mxu0 0.0
        %1438 = vmatprep.subr.mxu0 %v1402
        %1439 = vmatpush1.msra.mxu0 %v1400
        %1440 = vmatprep.subr.mxu0 %v1396
        %1441 = vmatpush1.msra.mxu0 %v1394
        %1442 = vmatprep.subr.mxu0 0.0
        %1443 = vmatpush2.msra.mxu0 0.0
        %1444 = vmatprep.subr.mxu0 0.0
        %1445 = vmatpush2.msra.mxu0 0.0
        %1446 = vmatprep.subr.mxu0 0.0
        %1447 = vmatpush2.msra.mxu0 0.0
        %1448 = vmatprep.subr.mxu0 0.0
        %1449 = vmatpush2.msra.mxu0 0.0
        %1450 = vmatprep.subr.mxu0 0.0
        %1451 = vmatpush2.msra.mxu0 0.0
        %1452 = vmatprep.subr.mxu0 0.0
        %1453 = vmatpush2.msra.mxu0 0.0
        %1454 = vmatprep.subr.mxu0 0.0
        %1455 = vmatpush2.msra.mxu0 0.0
        %1456 = vmatprep.subr.mxu0 0.0
        %1457 = vmatpush2.msra.mxu0 0.0
        %1458 = vmatprep.subr.mxu0 0.0
        %1459 = vmatpush2.msra.mxu0 0.0
        %1460 = vmatprep.subr.mxu0 0.0
        %1461 = vmatpush2.msra.mxu0 0.0
        %1462 = vmatprep.subr.mxu0 0.0
        %1463 = vmatpush2.msra.mxu0 0.0
        %1464 = vmatprep.subr.mxu0 0.0
        %1465 = vmatpush2.msra.mxu0 0.0
        %1466 = vmatprep.subr.mxu0 0.0
        %1467 = vmatpush2.msra.mxu0 0.0
        %1468 = vmatprep.subr.mxu0 0.0
        %1469 = vmatpush2.msra.mxu0 0.0
        %1470 = vmatprep.subr.mxu0 0.0
        %1471 = vmatpush2.msra.mxu0 0.0
        %1472 = vmatprep.subr.mxu0 0.0
        %1473 = vmatpush2.msra.mxu0 0.0
        %1474 = vmatprep.mubr.f32.mxu0 0.0
        %1475 = vmatmul.mubr.f32.gmra.mxu0 %v1405
        %v1476 = vpop.f32.mrf.mxu0
        %v1477 = vadd.f32 0.0, %v1476
        %v1478 = vpop.f32.mrf.mxu0
        %v1479 = vadd.f32 0.0, %v1478
        %1480 = vmatprep.mubr.f32.mxu0 0.0
        %1481 = vmatmul.mubr.f32.gmra.mxu0 %v1408
        %v1482 = vpop.f32.mrf.mxu0
        %v1483 = vadd.f32 0.0, %v1482
        %v1484 = vpop.f32.mrf.mxu0
        %v1485 = vadd.f32 0.0, %v1484
        %1486 = vdwg.mxu0
        %1487 = vmatprep.subr.mxu0 %v1294
        %1488 = vmatpush1.msra.mxu0 %v1293
        %1489 = vmatprep.subr.mxu0 %v1292
        %1490 = vmatpush1.msra.mxu0 %v1291
        %1491 = vmatprep.subr.mxu0 %v1290
        %1492 = vmatpush1.msra.mxu0 %v1289
        %1493 = vmatprep.subr.mxu0 %v1288
        %1494 = vmatpush1.msra.mxu0 %v1287
        %1495 = vmatprep.subr.mxu0 %v1286
        %1496 = vmatpush1.msra.mxu0 %v1285
        %1497 = vmatprep.subr.mxu0 %v1284
        %1498 = vmatpush1.msra.mxu0 %v1283
        %1499 = vmatprep.subr.mxu0 %v1282
        %1500 = vmatpush1.msra.mxu0 %v1281
        %1501 = vmatprep.subr.mxu0 %v1280
        %1502 = vmatpush1.msra.mxu0 %v1279
        %1503 = vmatprep.subr.mxu0 %v1278
        %1504 = vmatpush1.msra.mxu0 %v1277
        %1505 = vmatprep.subr.mxu0 %v1276
        %1506 = vmatpush1.msra.mxu0 %v1275
        %1507 = vmatprep.subr.mxu0 %v1274
        %1508 = vmatpush1.msra.mxu0 %v1273
        %1509 = vmatprep.subr.mxu0 %v1272
        %1510 = vmatpush1.msra.mxu0 %v1271
        %1511 = vmatprep.subr.mxu0 %v1270
        %1512 = vmatpush1.msra.mxu0 %v1269
        %1513 = vmatprep.subr.mxu0 %v1268
        %1514 = vmatpush1.msra.mxu0 %v1267
        %1515 = vmatprep.subr.mxu0 %v1266
        %1516 = vmatpush1.msra.mxu0 %v1265
        %1517 = vmatprep.subr.mxu0 %v1264
        %1518 = vmatpush1.msra.mxu0 %v1263
        %1519 = vmatprep.subr.mxu0 %v1326
        %1520 = vmatpush2.msra.mxu0 %v1325
        %1521 = vmatprep.subr.mxu0 %v1324
        %1522 = vmatpush2.msra.mxu0 %v1323
        %1523 = vmatprep.subr.mxu0 %v1322
        %1524 = vmatpush2.msra.mxu0 %v1321
        %1525 = vmatprep.subr.mxu0 %v1320
        %1526 = vmatpush2.msra.mxu0 %v1319
        %1527 = vmatprep.subr.mxu0 %v1318
        %1528 = vmatpush2.msra.mxu0 %v1317
        %1529 = vmatprep.subr.mxu0 %v1316
        %1530 = vmatpush2.msra.mxu0 %v1315
        %1531 = vmatprep.subr.mxu0 %v1314
        %1532 = vmatpush2.msra.mxu0 %v1313
        %1533 = vmatprep.subr.mxu0 %v1312
        %1534 = vmatpush2.msra.mxu0 %v1311
        %1535 = vmatprep.subr.mxu0 %v1310
        %1536 = vmatpush2.msra.mxu0 %v1309
        %1537 = vmatprep.subr.mxu0 %v1308
        %1538 = vmatpush2.msra.mxu0 %v1307
        %1539 = vmatprep.subr.mxu0 %v1306
        %1540 = vmatpush2.msra.mxu0 %v1305
        %1541 = vmatprep.subr.mxu0 %v1304
        %1542 = vmatpush2.msra.mxu0 %v1303
        %1543 = vmatprep.subr.mxu0 %v1302
        %1544 = vmatpush2.msra.mxu0 %v1301
        %1545 = vmatprep.subr.mxu0 %v1300
        %1546 = vmatpush2.msra.mxu0 %v1299
        %1547 = vmatprep.subr.mxu0 %v1298
        %1548 = vmatpush2.msra.mxu0 %v1297
        %1549 = vmatprep.subr.mxu0 %v1296
        %1550 = vmatpush2.msra.mxu0 %v1295
        %1551 = vmatprep.mubr.f32.mxu0 %v482
        %1552 = vmatmul.mubr.f32.gmra.mxu0 %v481
        %v1553 = vpop.f32.mrf.mxu0
        %v1554 = vadd.f32 0.0, %v1553
        %v1555 = vpop.f32.mrf.mxu0
        %v1556 = vadd.f32 0.0, %v1555
        %1557 = vmatprep.mubr.f32.mxu0 %v484
        %1558 = vmatmul.mubr.f32.gmra.mxu0 %v483
        %v1559 = vpop.f32.mrf.mxu0
        %v1560 = vadd.f32 0.0, %v1559
        %v1561 = vpop.f32.mrf.mxu0
        %v1562 = vadd.f32 0.0, %v1561
        %1563 = vdwg.mxu0
        %1564 = vmatprep.subr.mxu0 0.0
        %1565 = vmatpush1.msra.mxu0 0.0
        %1566 = vmatprep.subr.mxu0 0.0
        %1567 = vmatpush1.msra.mxu0 0.0
        %1568 = vmatprep.subr.mxu0 0.0
        %1569 = vmatpush1.msra.mxu0 0.0
        %1570 = vmatprep.subr.mxu0 0.0
        %1571 = vmatpush1.msra.mxu0 0.0
        %1572 = vmatprep.subr.mxu0 0.0
        %1573 = vmatpush1.msra.mxu0 0.0
        %1574 = vmatprep.subr.mxu0 0.0
        %1575 = vmatpush1.msra.mxu0 0.0
        %1576 = vmatprep.subr.mxu0 0.0
        %1577 = vmatpush1.msra.mxu0 0.0
        %1578 = vmatprep.subr.mxu0 0.0
        %1579 = vmatpush1.msra.mxu0 0.0
        %1580 = vmatprep.subr.mxu0 0.0
        %1581 = vmatpush1.msra.mxu0 0.0
        %1582 = vmatprep.subr.mxu0 0.0
        %1583 = vmatpush1.msra.mxu0 0.0
        %1584 = vmatprep.subr.mxu0 0.0
        %1585 = vmatpush1.msra.mxu0 0.0
        %1586 = vmatprep.subr.mxu0 0.0
        %1587 = vmatpush1.msra.mxu0 0.0
        %1588 = vmatprep.subr.mxu0 0.0
        %1589 = vmatpush1.msra.mxu0 0.0
        %1590 = vmatprep.subr.mxu0 0.0
        %1591 = vmatpush1.msra.mxu0 0.0
        %1592 = vmatprep.subr.mxu0 %v1562
        %1593 = vmatpush1.msra.mxu0 %v1560
        %1594 = vmatprep.subr.mxu0 %v1556
        %1595 = vmatpush1.msra.mxu0 %v1554
        %1596 = vmatprep.subr.mxu0 0.0
        %1597 = vmatpush2.msra.mxu0 0.0
        %1598 = vmatprep.subr.mxu0 0.0
        %1599 = vmatpush2.msra.mxu0 0.0
        %1600 = vmatprep.subr.mxu0 0.0
        %1601 = vmatpush2.msra.mxu0 0.0
        %1602 = vmatprep.subr.mxu0 0.0
        %1603 = vmatpush2.msra.mxu0 0.0
        %1604 = vmatprep.subr.mxu0 0.0
        %1605 = vmatpush2.msra.mxu0 0.0
        %1606 = vmatprep.subr.mxu0 0.0
        %1607 = vmatpush2.msra.mxu0 0.0
        %1608 = vmatprep.subr.mxu0 0.0
        %1609 = vmatpush2.msra.mxu0 0.0
        %1610 = vmatprep.subr.mxu0 0.0
        %1611 = vmatpush2.msra.mxu0 0.0
        %1612 = vmatprep.subr.mxu0 0.0
        %1613 = vmatpush2.msra.mxu0 0.0
        %1614 = vmatprep.subr.mxu0 0.0
        %1615 = vmatpush2.msra.mxu0 0.0
        %1616 = vmatprep.subr.mxu0 0.0
        %1617 = vmatpush2.msra.mxu0 0.0
        %1618 = vmatprep.subr.mxu0 0.0
        %1619 = vmatpush2.msra.mxu0 0.0
        %1620 = vmatprep.subr.mxu0 0.0
        %1621 = vmatpush2.msra.mxu0 0.0
        %1622 = vmatprep.subr.mxu0 0.0
        %1623 = vmatpush2.msra.mxu0 0.0
        %1624 = vmatprep.subr.mxu0 0.0
        %1625 = vmatpush2.msra.mxu0 0.0
        %1626 = vmatprep.subr.mxu0 0.0
        %1627 = vmatpush2.msra.mxu0 0.0
        %1628 = vmatprep.mubr.f32.mxu0 0.0
        %1629 = vmatmul.mubr.f32.gmra.mxu0 %v1405
        %v1630 = vpop.f32.mrf.mxu0
        %v1631 = vadd.f32 0.0, %v1630
        %v1632 = vpop.f32.mrf.mxu0
        %v1633 = vadd.f32 0.0, %v1632
        %1634 = vmatprep.mubr.f32.mxu0 0.0
        %1635 = vmatmul.mubr.f32.gmra.mxu0 %v1408
        %v1636 = vpop.f32.mrf.mxu0
        %v1637 = vadd.f32 0.0, %v1636
        %v1638 = vpop.f32.mrf.mxu0
        %v1639 = vadd.f32 0.0, %v1638
        %1640 = vdwg.mxu0
        %v1641 = vmul.f32 %v477, %v477
        %v1642 = vmul.f32 %v478, %v478
        %v1643 = vmul.f32 %v479, %v479
        %v1644 = vmul.f32 %v480, %v480
        %1645 = vmatprep.subr.mxu0 %v1294
        %1646 = vmatpush1.msra.mxu0 %v1293
        %1647 = vmatprep.subr.mxu0 %v1292
        %1648 = vmatpush1.msra.mxu0 %v1291
        %1649 = vmatprep.subr.mxu0 %v1290
        %1650 = vmatpush1.msra.mxu0 %v1289
        %1651 = vmatprep.subr.mxu0 %v1288
        %1652 = vmatpush1.msra.mxu0 %v1287
        %1653 = vmatprep.subr.mxu0 %v1286
        %1654 = vmatpush1.msra.mxu0 %v1285
        %1655 = vmatprep.subr.mxu0 %v1284
        %1656 = vmatpush1.msra.mxu0 %v1283
        %1657 = vmatprep.subr.mxu0 %v1282
        %1658 = vmatpush1.msra.mxu0 %v1281
        %1659 = vmatprep.subr.mxu0 %v1280
        %1660 = vmatpush1.msra.mxu0 %v1279
        %1661 = vmatprep.subr.mxu0 %v1278
        %1662 = vmatpush1.msra.mxu0 %v1277
        %1663 = vmatprep.subr.mxu0 %v1276
        %1664 = vmatpush1.msra.mxu0 %v1275
        %1665 = vmatprep.subr.mxu0 %v1274
        %1666 = vmatpush1.msra.mxu0 %v1273
        %1667 = vmatprep.subr.mxu0 %v1272
        %1668 = vmatpush1.msra.mxu0 %v1271
        %1669 = vmatprep.subr.mxu0 %v1270
        %1670 = vmatpush1.msra.mxu0 %v1269
        %1671 = vmatprep.subr.mxu0 %v1268
        %1672 = vmatpush1.msra.mxu0 %v1267
        %1673 = vmatprep.subr.mxu0 %v1266
        %1674 = vmatpush1.msra.mxu0 %v1265
        %1675 = vmatprep.subr.mxu0 %v1264
        %1676 = vmatpush1.msra.mxu0 %v1263
        %1677 = vmatprep.subr.mxu0 %v1326
        %1678 = vmatpush2.msra.mxu0 %v1325
        %1679 = vmatprep.subr.mxu0 %v1324
        %1680 = vmatpush2.msra.mxu0 %v1323
        %1681 = vmatprep.subr.mxu0 %v1322
        %1682 = vmatpush2.msra.mxu0 %v1321
        %1683 = vmatprep.subr.mxu0 %v1320
        %1684 = vmatpush2.msra.mxu0 %v1319
        %1685 = vmatprep.subr.mxu0 %v1318
        %1686 = vmatpush2.msra.mxu0 %v1317
        %1687 = vmatprep.subr.mxu0 %v1316
        %1688 = vmatpush2.msra.mxu0 %v1315
        %1689 = vmatprep.subr.mxu0 %v1314
        %1690 = vmatpush2.msra.mxu0 %v1313
        %1691 = vmatprep.subr.mxu0 %v1312
        %1692 = vmatpush2.msra.mxu0 %v1311
        %1693 = vmatprep.subr.mxu0 %v1310
        %1694 = vmatpush2.msra.mxu0 %v1309
        %1695 = vmatprep.subr.mxu0 %v1308
        %1696 = vmatpush2.msra.mxu0 %v1307
        %1697 = vmatprep.subr.mxu0 %v1306
        %1698 = vmatpush2.msra.mxu0 %v1305
        %1699 = vmatprep.subr.mxu0 %v1304
        %1700 = vmatpush2.msra.mxu0 %v1303
        %1701 = vmatprep.subr.mxu0 %v1302
        %1702 = vmatpush2.msra.mxu0 %v1301
        %1703 = vmatprep.subr.mxu0 %v1300
        %1704 = vmatpush2.msra.mxu0 %v1299
        %1705 = vmatprep.subr.mxu0 %v1298
        %1706 = vmatpush2.msra.mxu0 %v1297
        %1707 = vmatprep.subr.mxu0 %v1296
        %1708 = vmatpush2.msra.mxu0 %v1295
        %1709 = vmatprep.mubr.f32.mxu0 %v1642
        %1710 = vmatmul.mubr.f32.gmra.mxu0 %v1641
        %v1711 = vpop.f32.mrf.mxu0
        %v1712 = vadd.f32 0.0, %v1711
        %v1713 = vpop.f32.mrf.mxu0
        %v1714 = vadd.f32 0.0, %v1713
        %1715 = vmatprep.mubr.f32.mxu0 %v1644
        %1716 = vmatmul.mubr.f32.gmra.mxu0 %v1643
        %v1717 = vpop.f32.mrf.mxu0
        %v1718 = vadd.f32 0.0, %v1717
        %v1719 = vpop.f32.mrf.mxu0
        %v1720 = vadd.f32 0.0, %v1719
        %1721 = vdwg.mxu0
        %1722 = vmatprep.subr.mxu0 0.0
        %1723 = vmatpush1.msra.mxu0 0.0
        %1724 = vmatprep.subr.mxu0 0.0
        %1725 = vmatpush1.msra.mxu0 0.0
        %1726 = vmatprep.subr.mxu0 0.0
        %1727 = vmatpush1.msra.mxu0 0.0
        %1728 = vmatprep.subr.mxu0 0.0
        %1729 = vmatpush1.msra.mxu0 0.0
        %1730 = vmatprep.subr.mxu0 0.0
        %1731 = vmatpush1.msra.mxu0 0.0
        %1732 = vmatprep.subr.mxu0 0.0
        %1733 = vmatpush1.msra.mxu0 0.0
        %1734 = vmatprep.subr.mxu0 0.0
        %1735 = vmatpush1.msra.mxu0 0.0
        %1736 = vmatprep.subr.mxu0 0.0
        %1737 = vmatpush1.msra.mxu0 0.0
        %1738 = vmatprep.subr.mxu0 0.0
        %1739 = vmatpush1.msra.mxu0 0.0
        %1740 = vmatprep.subr.mxu0 0.0
        %1741 = vmatpush1.msra.mxu0 0.0
        %1742 = vmatprep.subr.mxu0 0.0
        %1743 = vmatpush1.msra.mxu0 0.0
        %1744 = vmatprep.subr.mxu0 0.0
        %1745 = vmatpush1.msra.mxu0 0.0
        %1746 = vmatprep.subr.mxu0 0.0
        %1747 = vmatpush1.msra.mxu0 0.0
        %1748 = vmatprep.subr.mxu0 0.0
        %1749 = vmatpush1.msra.mxu0 0.0
        %1750 = vmatprep.subr.mxu0 %v1720
        %1751 = vmatpush1.msra.mxu0 %v1718
        %1752 = vmatprep.subr.mxu0 %v1714
        %1753 = vmatpush1.msra.mxu0 %v1712
        %1754 = vmatprep.subr.mxu0 0.0
        %1755 = vmatpush2.msra.mxu0 0.0
        %1756 = vmatprep.subr.mxu0 0.0
        %1757 = vmatpush2.msra.mxu0 0.0
        %1758 = vmatprep.subr.mxu0 0.0
        %1759 = vmatpush2.msra.mxu0 0.0
        %1760 = vmatprep.subr.mxu0 0.0
        %1761 = vmatpush2.msra.mxu0 0.0
        %1762 = vmatprep.subr.mxu0 0.0
        %1763 = vmatpush2.msra.mxu0 0.0
        %1764 = vmatprep.subr.mxu0 0.0
        %1765 = vmatpush2.msra.mxu0 0.0
        %1766 = vmatprep.subr.mxu0 0.0
        %1767 = vmatpush2.msra.mxu0 0.0
        %1768 = vmatprep.subr.mxu0 0.0
        %1769 = vmatpush2.msra.mxu0 0.0
        %1770 = vmatprep.subr.mxu0 0.0
        %1771 = vmatpush2.msra.mxu0 0.0
        %1772 = vmatprep.subr.mxu0 0.0
        %1773 = vmatpush2.msra.mxu0 0.0
        %1774 = vmatprep.subr.mxu0 0.0
        %1775 = vmatpush2.msra.mxu0 0.0
        %1776 = vmatprep.subr.mxu0 0.0
        %1777 = vmatpush2.msra.mxu0 0.0
        %1778 = vmatprep.subr.mxu0 0.0
        %1779 = vmatpush2.msra.mxu0 0.0
        %1780 = vmatprep.subr.mxu0 0.0
        %1781 = vmatpush2.msra.mxu0 0.0
        %1782 = vmatprep.subr.mxu0 0.0
        %1783 = vmatpush2.msra.mxu0 0.0
        %1784 = vmatprep.subr.mxu0 0.0
        %1785 = vmatpush2.msra.mxu0 0.0
        %1786 = vmatprep.mubr.f32.mxu0 0.0
        %1787 = vmatmul.mubr.f32.gmra.mxu0 %v1405
        %v1788 = vpop.f32.mrf.mxu0
        %v1789 = vadd.f32 0.0, %v1788
        %v1790 = vpop.f32.mrf.mxu0
        %v1791 = vadd.f32 0.0, %v1790
        %1792 = vmatprep.mubr.f32.mxu0 0.0
        %1793 = vmatmul.mubr.f32.gmra.mxu0 %v1408
        %v1794 = vpop.f32.mrf.mxu0
        %v1795 = vadd.f32 0.0, %v1794
        %v1796 = vpop.f32.mrf.mxu0
        %v1797 = vadd.f32 0.0, %v1796
        %1798 = vdwg.mxu0
        %v1799 = vmul.f32 %v481, %v481
        %v1800 = vmul.f32 %v482, %v482
        %v1801 = vmul.f32 %v483, %v483
        %v1802 = vmul.f32 %v484, %v484
        %1803 = vmatprep.subr.mxu0 %v1294
        %1804 = vmatpush1.msra.mxu0 %v1293
        %1805 = vmatprep.subr.mxu0 %v1292
        %1806 = vmatpush1.msra.mxu0 %v1291
        %1807 = vmatprep.subr.mxu0 %v1290
        %1808 = vmatpush1.msra.mxu0 %v1289
        %1809 = vmatprep.subr.mxu0 %v1288
        %1810 = vmatpush1.msra.mxu0 %v1287
        %1811 = vmatprep.subr.mxu0 %v1286
        %1812 = vmatpush1.msra.mxu0 %v1285
        %1813 = vmatprep.subr.mxu0 %v1284
        %1814 = vmatpush1.msra.mxu0 %v1283
        %1815 = vmatprep.subr.mxu0 %v1282
        %1816 = vmatpush1.msra.mxu0 %v1281
        %1817 = vmatprep.subr.mxu0 %v1280
        %1818 = vmatpush1.msra.mxu0 %v1279
        %1819 = vmatprep.subr.mxu0 %v1278
        %1820 = vmatpush1.msra.mxu0 %v1277
        %1821 = vmatprep.subr.mxu0 %v1276
        %1822 = vmatpush1.msra.mxu0 %v1275
        %1823 = vmatprep.subr.mxu0 %v1274
        %1824 = vmatpush1.msra.mxu0 %v1273
        %1825 = vmatprep.subr.mxu0 %v1272
        %1826 = vmatpush1.msra.mxu0 %v1271
        %1827 = vmatprep.subr.mxu0 %v1270
        %1828 = vmatpush1.msra.mxu0 %v1269
        %1829 = vmatprep.subr.mxu0 %v1268
        %1830 = vmatpush1.msra.mxu0 %v1267
        %1831 = vmatprep.subr.mxu0 %v1266
        %1832 = vmatpush1.msra.mxu0 %v1265
        %1833 = vmatprep.subr.mxu0 %v1264
        %1834 = vmatpush1.msra.mxu0 %v1263
        %1835 = vmatprep.subr.mxu0 %v1326
        %1836 = vmatpush2.msra.mxu0 %v1325
        %1837 = vmatprep.subr.mxu0 %v1324
        %1838 = vmatpush2.msra.mxu0 %v1323
        %1839 = vmatprep.subr.mxu0 %v1322
        %1840 = vmatpush2.msra.mxu0 %v1321
        %1841 = vmatprep.subr.mxu0 %v1320
        %1842 = vmatpush2.msra.mxu0 %v1319
        %1843 = vmatprep.subr.mxu0 %v1318
        %1844 = vmatpush2.msra.mxu0 %v1317
        %1845 = vmatprep.subr.mxu0 %v1316
        %1846 = vmatpush2.msra.mxu0 %v1315
        %1847 = vmatprep.subr.mxu0 %v1314
        %1848 = vmatpush2.msra.mxu0 %v1313
        %1849 = vmatprep.subr.mxu0 %v1312
        %1850 = vmatpush2.msra.mxu0 %v1311
        %1851 = vmatprep.subr.mxu0 %v1310
        %1852 = vmatpush2.msra.mxu0 %v1309
        %1853 = vmatprep.subr.mxu0 %v1308
        %1854 = vmatpush2.msra.mxu0 %v1307
        %1855 = vmatprep.subr.mxu0 %v1306
        %1856 = vmatpush2.msra.mxu0 %v1305
        %1857 = vmatprep.subr.mxu0 %v1304
        %1858 = vmatpush2.msra.mxu0 %v1303
        %1859 = vmatprep.subr.mxu0 %v1302
        %1860 = vmatpush2.msra.mxu0 %v1301
        %1861 = vmatprep.subr.mxu0 %v1300
        %1862 = vmatpush2.msra.mxu0 %v1299
        %1863 = vmatprep.subr.mxu0 %v1298
        %1864 = vmatpush2.msra.mxu0 %v1297
        %1865 = vmatprep.subr.mxu0 %v1296
        %1866 = vmatpush2.msra.mxu0 %v1295
        %1867 = vmatprep.mubr.f32.mxu0 %v1800
        %1868 = vmatmul.mubr.f32.gmra.mxu0 %v1799
        %v1869 = vpop.f32.mrf.mxu0
        %v1870 = vadd.f32 0.0, %v1869
        %v1871 = vpop.f32.mrf.mxu0
        %v1872 = vadd.f32 0.0, %v1871
        %1873 = vmatprep.mubr.f32.mxu0 %v1802
        %1874 = vmatmul.mubr.f32.gmra.mxu0 %v1801
        %v1875 = vpop.f32.mrf.mxu0
        %v1876 = vadd.f32 0.0, %v1875
        %v1877 = vpop.f32.mrf.mxu0
        %v1878 = vadd.f32 0.0, %v1877
        %1879 = vdwg.mxu0
        %1880 = vmatprep.subr.mxu0 0.0
        %1881 = vmatpush1.msra.mxu0 0.0
        %1882 = vmatprep.subr.mxu0 0.0
        %1883 = vmatpush1.msra.mxu0 0.0
        %1884 = vmatprep.subr.mxu0 0.0
        %1885 = vmatpush1.msra.mxu0 0.0
        %1886 = vmatprep.subr.mxu0 0.0
        %1887 = vmatpush1.msra.mxu0 0.0
        %1888 = vmatprep.subr.mxu0 0.0
        %1889 = vmatpush1.msra.mxu0 0.0
        %1890 = vmatprep.subr.mxu0 0.0
        %1891 = vmatpush1.msra.mxu0 0.0
        %1892 = vmatprep.subr.mxu0 0.0
        %1893 = vmatpush1.msra.mxu0 0.0
        %1894 = vmatprep.subr.mxu0 0.0
        %1895 = vmatpush1.msra.mxu0 0.0
        %1896 = vmatprep.subr.mxu0 0.0
        %1897 = vmatpush1.msra.mxu0 0.0
        %1898 = vmatprep.subr.mxu0 0.0
        %1899 = vmatpush1.msra.mxu0 0.0
        %1900 = vmatprep.subr.mxu0 0.0
        %1901 = vmatpush1.msra.mxu0 0.0
        %1902 = vmatprep.subr.mxu0 0.0
        %1903 = vmatpush1.msra.mxu0 0.0
        %1904 = vmatprep.subr.mxu0 0.0
        %1905 = vmatpush1.msra.mxu0 0.0
        %1906 = vmatprep.subr.mxu0 0.0
        %1907 = vmatpush1.msra.mxu0 0.0
        %1908 = vmatprep.subr.mxu0 %v1878
        %1909 = vmatpush1.msra.mxu0 %v1876
        %1910 = vmatprep.subr.mxu0 %v1872
        %1911 = vmatpush1.msra.mxu0 %v1870
        %1912 = vmatprep.subr.mxu0 0.0
        %1913 = vmatpush2.msra.mxu0 0.0
        %1914 = vmatprep.subr.mxu0 0.0
        %1915 = vmatpush2.msra.mxu0 0.0
        %1916 = vmatprep.subr.mxu0 0.0
        %1917 = vmatpush2.msra.mxu0 0.0
        %1918 = vmatprep.subr.mxu0 0.0
        %1919 = vmatpush2.msra.mxu0 0.0
        %1920 = vmatprep.subr.mxu0 0.0
        %1921 = vmatpush2.msra.mxu0 0.0
        %1922 = vmatprep.subr.mxu0 0.0
        %1923 = vmatpush2.msra.mxu0 0.0
        %1924 = vmatprep.subr.mxu0 0.0
        %1925 = vmatpush2.msra.mxu0 0.0
        %1926 = vmatprep.subr.mxu0 0.0
        %1927 = vmatpush2.msra.mxu0 0.0
        %1928 = vmatprep.subr.mxu0 0.0
        %1929 = vmatpush2.msra.mxu0 0.0
        %1930 = vmatprep.subr.mxu0 0.0
        %1931 = vmatpush2.msra.mxu0 0.0
        %1932 = vmatprep.subr.mxu0 0.0
        %1933 = vmatpush2.msra.mxu0 0.0
        %1934 = vmatprep.subr.mxu0 0.0
        %1935 = vmatpush2.msra.mxu0 0.0
        %1936 = vmatprep.subr.mxu0 0.0
        %1937 = vmatpush2.msra.mxu0 0.0
        %1938 = vmatprep.subr.mxu0 0.0
        %1939 = vmatpush2.msra.mxu0 0.0
        %1940 = vmatprep.subr.mxu0 0.0
        %1941 = vmatpush2.msra.mxu0 0.0
        %1942 = vmatprep.subr.mxu0 0.0
        %1943 = vmatpush2.msra.mxu0 0.0
        %1944 = vmatprep.mubr.f32.mxu0 0.0
        %1945 = vmatmul.mubr.f32.gmra.mxu0 %v1405
        %v1946 = vpop.f32.mrf.mxu0
        %v1947 = vadd.f32 0.0, %v1946
        %v1948 = vpop.f32.mrf.mxu0
        %v1949 = vadd.f32 0.0, %v1948
        %1950 = vmatprep.mubr.f32.mxu0 0.0
        %1951 = vmatmul.mubr.f32.gmra.mxu0 %v1408
        %v1952 = vpop.f32.mrf.mxu0
        %v1953 = vadd.f32 0.0, %v1952
        %v1954 = vpop.f32.mrf.mxu0
        %v1955 = vadd.f32 0.0, %v1954
        %1956 = vdwg.mxu0
        %v1957 = vmul.f32 %v477, %v481
        %v1958 = vmul.f32 %v478, %v482
        %v1959 = vmul.f32 %v479, %v483
        %v1960 = vmul.f32 %v480, %v484
        %1961 = vmatprep.subr.mxu0 %v1294
        %1962 = vmatpush1.msra.mxu0 %v1293
        %1963 = vmatprep.subr.mxu0 %v1292
        %1964 = vmatpush1.msra.mxu0 %v1291
        %1965 = vmatprep.subr.mxu0 %v1290
        %1966 = vmatpush1.msra.mxu0 %v1289
        %1967 = vmatprep.subr.mxu0 %v1288
        %1968 = vmatpush1.msra.mxu0 %v1287
        %1969 = vmatprep.subr.mxu0 %v1286
        %1970 = vmatpush1.msra.mxu0 %v1285
        %1971 = vmatprep.subr.mxu0 %v1284
        %1972 = vmatpush1.msra.mxu0 %v1283
        %1973 = vmatprep.subr.mxu0 %v1282
        %1974 = vmatpush1.msra.mxu0 %v1281
        %1975 = vmatprep.subr.mxu0 %v1280
        %1976 = vmatpush1.msra.mxu0 %v1279
        %1977 = vmatprep.subr.mxu0 %v1278
        %1978 = vmatpush1.msra.mxu0 %v1277
        %1979 = vmatprep.subr.mxu0 %v1276
        %1980 = vmatpush1.msra.mxu0 %v1275
        %1981 = vmatprep.subr.mxu0 %v1274
        %1982 = vmatpush1.msra.mxu0 %v1273
        %1983 = vmatprep.subr.mxu0 %v1272
        %1984 = vmatpush1.msra.mxu0 %v1271
        %1985 = vmatprep.subr.mxu0 %v1270
        %1986 = vmatpush1.msra.mxu0 %v1269
        %1987 = vmatprep.subr.mxu0 %v1268
        %1988 = vmatpush1.msra.mxu0 %v1267
        %1989 = vmatprep.subr.mxu0 %v1266
        %1990 = vmatpush1.msra.mxu0 %v1265
        %1991 = vmatprep.subr.mxu0 %v1264
        %1992 = vmatpush1.msra.mxu0 %v1263
        %1993 = vmatprep.subr.mxu0 %v1326
        %1994 = vmatpush2.msra.mxu0 %v1325
        %1995 = vmatprep.subr.mxu0 %v1324
        %1996 = vmatpush2.msra.mxu0 %v1323
        %1997 = vmatprep.subr.mxu0 %v1322
        %1998 = vmatpush2.msra.mxu0 %v1321
        %1999 = vmatprep.subr.mxu0 %v1320
        %2000 = vmatpush2.msra.mxu0 %v1319
        %2001 = vmatprep.subr.mxu0 %v1318
        %2002 = vmatpush2.msra.mxu0 %v1317
        %2003 = vmatprep.subr.mxu0 %v1316
        %2004 = vmatpush2.msra.mxu0 %v1315
        %2005 = vmatprep.subr.mxu0 %v1314
        %2006 = vmatpush2.msra.mxu0 %v1313
        %2007 = vmatprep.subr.mxu0 %v1312
        %2008 = vmatpush2.msra.mxu0 %v1311
        %2009 = vmatprep.subr.mxu0 %v1310
        %2010 = vmatpush2.msra.mxu0 %v1309
        %2011 = vmatprep.subr.mxu0 %v1308
        %2012 = vmatpush2.msra.mxu0 %v1307
        %2013 = vmatprep.subr.mxu0 %v1306
        %2014 = vmatpush2.msra.mxu0 %v1305
        %2015 = vmatprep.subr.mxu0 %v1304
        %2016 = vmatpush2.msra.mxu0 %v1303
        %2017 = vmatprep.subr.mxu0 %v1302
        %2018 = vmatpush2.msra.mxu0 %v1301
        %2019 = vmatprep.subr.mxu0 %v1300
        %2020 = vmatpush2.msra.mxu0 %v1299
        %2021 = vmatprep.subr.mxu0 %v1298
        %2022 = vmatpush2.msra.mxu0 %v1297
        %2023 = vmatprep.subr.mxu0 %v1296
        %2024 = vmatpush2.msra.mxu0 %v1295
        %2025 = vmatprep.mubr.f32.mxu0 %v1958
        %2026 = vmatmul.mubr.f32.gmra.mxu0 %v1957
        %v2027 = vpop.f32.mrf.mxu0
        %v2028 = vadd.f32 0.0, %v2027
        %v2029 = vpop.f32.mrf.mxu0
        %v2030 = vadd.f32 0.0, %v2029
        %2031 = vmatprep.mubr.f32.mxu0 %v1960
        %2032 = vmatmul.mubr.f32.gmra.mxu0 %v1959
        %v2033 = vpop.f32.mrf.mxu0
        %v2034 = vadd.f32 0.0, %v2033
        %v2035 = vpop.f32.mrf.mxu0
        %v2036 = vadd.f32 0.0, %v2035
        %2037 = vdwg.mxu0
        %2038 = vmatprep.subr.mxu0 0.0
        %2039 = vmatpush1.msra.mxu0 0.0
        %2040 = vmatprep.subr.mxu0 0.0
        %2041 = vmatpush1.msra.mxu0 0.0
        %2042 = vmatprep.subr.mxu0 0.0
        %2043 = vmatpush1.msra.mxu0 0.0
        %2044 = vmatprep.subr.mxu0 0.0
        %2045 = vmatpush1.msra.mxu0 0.0
        %2046 = vmatprep.subr.mxu0 0.0
        %2047 = vmatpush1.msra.mxu0 0.0
        %2048 = vmatprep.subr.mxu0 0.0
        %2049 = vmatpush1.msra.mxu0 0.0
        %2050 = vmatprep.subr.mxu0 0.0
        %2051 = vmatpush1.msra.mxu0 0.0
        %2052 = vmatprep.subr.mxu0 0.0
        %2053 = vmatpush1.msra.mxu0 0.0
        %2054 = vmatprep.subr.mxu0 0.0
        %2055 = vmatpush1.msra.mxu0 0.0
        %2056 = vmatprep.subr.mxu0 0.0
        %2057 = vmatpush1.msra.mxu0 0.0
        %2058 = vmatprep.subr.mxu0 0.0
        %2059 = vmatpush1.msra.mxu0 0.0
        %2060 = vmatprep.subr.mxu0 0.0
        %2061 = vmatpush1.msra.mxu0 0.0
        %2062 = vmatprep.subr.mxu0 0.0
        %2063 = vmatpush1.msra.mxu0 0.0
        %2064 = vmatprep.subr.mxu0 0.0
        %2065 = vmatpush1.msra.mxu0 0.0
        %2066 = vmatprep.subr.mxu0 %v2036
        %2067 = vmatpush1.msra.mxu0 %v2034
        %2068 = vmatprep.subr.mxu0 %v2030
        %2069 = vmatpush1.msra.mxu0 %v2028
        %2070 = vmatprep.subr.mxu0 0.0
        %2071 = vmatpush2.msra.mxu0 0.0
        %2072 = vmatprep.subr.mxu0 0.0
        %2073 = vmatpush2.msra.mxu0 0.0
        %2074 = vmatprep.subr.mxu0 0.0
        %2075 = vmatpush2.msra.mxu0 0.0
        %2076 = vmatprep.subr.mxu0 0.0
        %2077 = vmatpush2.msra.mxu0 0.0
        %2078 = vmatprep.subr.mxu0 0.0
        %2079 = vmatpush2.msra.mxu0 0.0
        %2080 = vmatprep.subr.mxu0 0.0
        %2081 = vmatpush2.msra.mxu0 0.0
        %2082 = vmatprep.subr.mxu0 0.0
        %2083 = vmatpush2.msra.mxu0 0.0
        %2084 = vmatprep.subr.mxu0 0.0
        %2085 = vmatpush2.msra.mxu0 0.0
        %2086 = vmatprep.subr.mxu0 0.0
        %2087 = vmatpush2.msra.mxu0 0.0
        %2088 = vmatprep.subr.mxu0 0.0
        %2089 = vmatpush2.msra.mxu0 0.0
        %2090 = vmatprep.subr.mxu0 0.0
        %2091 = vmatpush2.msra.mxu0 0.0
        %2092 = vmatprep.subr.mxu0 0.0
        %2093 = vmatpush2.msra.mxu0 0.0
        %2094 = vmatprep.subr.mxu0 0.0
        %2095 = vmatpush2.msra.mxu0 0.0
        %2096 = vmatprep.subr.mxu0 0.0
        %2097 = vmatpush2.msra.mxu0 0.0
        %2098 = vmatprep.subr.mxu0 0.0
        %2099 = vmatpush2.msra.mxu0 0.0
        %2100 = vmatprep.subr.mxu0 0.0
        %2101 = vmatpush2.msra.mxu0 0.0
        %2102 = vmatprep.mubr.f32.mxu0 0.0
        %2103 = vmatmul.mubr.f32.gmra.mxu0 %v1405
        %v2104 = vpop.f32.mrf.mxu0
        %v2105 = vadd.f32 0.0, %v2104
        %v2106 = vpop.f32.mrf.mxu0
        %v2107 = vadd.f32 0.0, %v2106
        %2108 = vmatprep.mubr.f32.mxu0 0.0
        %2109 = vmatmul.mubr.f32.gmra.mxu0 %v1408
        %v2110 = vpop.f32.mrf.mxu0
        %v2111 = vadd.f32 0.0, %v2110
        %v2112 = vpop.f32.mrf.mxu0
        %v2113 = vadd.f32 0.0, %v2112
        %2114 = vdwg.mxu0
        %v2115 = vmul.f32 %v1477, %v1477
        %v2116 = vmul.f32 %v1479, %v1479
        %v2117 = vmul.f32 %v1483, %v1483
        %v2118 = vmul.f32 %v1485, %v1485
        %v2119 = vmul.f32 %v2115, 0.0625
        %v2120 = vmul.f32 %v2116, 0.0625
        %v2121 = vmul.f32 %v2117, 0.0625
        %v2122 = vmul.f32 %v2118, 0.0625
        %v2123 = vsub.f32 %v1789, %v2119
        %v2124 = vsub.f32 %v1791, %v2120
        %v2125 = vsub.f32 %v1795, %v2121
        %v2126 = vsub.f32 %v1797, %v2122
        %v2127 = vmax.f32 %v2123, 0.0
        %v2128 = vmax.f32 %v2124, 0.0
        %v2129 = vmax.f32 %v2125, 0.0
        %v2130 = vmax.f32 %v2126, 0.0
        %v2131 = vmul.f32 %v1631, %v1631
        %v2132 = vmul.f32 %v1633, %v1633
        %v2133 = vmul.f32 %v1637, %v1637
        %v2134 = vmul.f32 %v1639, %v1639
        %v2135 = vmul.f32 %v2131, 0.0625
        %v2136 = vmul.f32 %v2132, 0.0625
        %v2137 = vmul.f32 %v2133, 0.0625
        %v2138 = vmul.f32 %v2134, 0.0625
        %v2139 = vsub.f32 %v1947, %v2135
        %v2140 = vsub.f32 %v1949, %v2136
        %v2141 = vsub.f32 %v1953, %v2137
        %v2142 = vsub.f32 %v1955, %v2138
        %v2143 = vmax.f32 %v2139, 0.0
        %v2144 = vmax.f32 %v2140, 0.0
        %v2145 = vmax.f32 %v2141, 0.0
        %v2146 = vmax.f32 %v2142, 0.0
        %v2147 = vmul.f32 %v1477, %v1631
        %v2148 = vmul.f32 %v1479, %v1633
        %v2149 = vmul.f32 %v1483, %v1637
        %v2150 = vmul.f32 %v1485, %v1639
        %v2151 = vmul.f32 %v2147, 0.0625
        %v2152 = vmul.f32 %v2148, 0.0625
        %v2153 = vmul.f32 %v2149, 0.0625
        %v2154 = vmul.f32 %v2150, 0.0625
        %v2155 = vsub.f32 %v2105, %v2151
        %v2156 = vsub.f32 %v2107, %v2152
        %v2157 = vsub.f32 %v2111, %v2153
        %v2158 = vsub.f32 %v2113, %v2154
        %v2159 = vmul.f32 %v2127, 0.06666667
        %v2160 = vmul.f32 %v2128, 0.06666667
        %v2161 = vmul.f32 %v2129, 0.06666667
        %v2162 = vmul.f32 %v2130, 0.06666667
        %v2163 = vrsqrt.pop %v2159
        %v2164 = vmul.f32 %v2159, %v2163
        %vm2165 = vcmp.eq.f32.partialorder %v2159, inf
        %v2166 = vsel %vm2165, %v2159, %v2164
        %vm2167 = vcmp.eq.f32.partialorder %v2159, 0.0
        %v2168 = vand.u32 %v2159, 2147483648
        %v2169 = vsel %vm2167, %v2168, %v2166
        %v2170 = vrsqrt.pop %v2160
        %v2171 = vmul.f32 %v2160, %v2170
        %vm2172 = vcmp.eq.f32.partialorder %v2160, inf
        %v2173 = vsel %vm2172, %v2160, %v2171
        %vm2174 = vcmp.eq.f32.partialorder %v2160, 0.0
        %v2175 = vand.u32 %v2160, 2147483648
        %v2176 = vsel %vm2174, %v2175, %v2173
        %v2177 = vrsqrt.pop %v2161
        %v2178 = vmul.f32 %v2161, %v2177
        %vm2179 = vcmp.eq.f32.partialorder %v2161, inf
        %v2180 = vsel %vm2179, %v2161, %v2178
        %vm2181 = vcmp.eq.f32.partialorder %v2161, 0.0
        %v2182 = vand.u32 %v2161, 2147483648
        %v2183 = vsel %vm2181, %v2182, %v2180
        %v2184 = vrsqrt.pop %v2162
        %v2185 = vmul.f32 %v2162, %v2184
        %vm2186 = vcmp.eq.f32.partialorder %v2162, inf
        %v2187 = vsel %vm2186, %v2162, %v2185
        %vm2188 = vcmp.eq.f32.partialorder %v2162, 0.0
        %v2189 = vand.u32 %v2162, 2147483648
        %v2190 = vsel %vm2188, %v2189, %v2187
        %v2191 = vadd.f32 %v2169, 1e-06
        %v2192 = vadd.f32 %v2176, 1e-06
        %v2193 = vadd.f32 %v2183, 1e-06
        %v2194 = vadd.f32 %v2190, 1e-06
        %v2195 = vmul.f32 %v2143, 0.06666667
        %v2196 = vmul.f32 %v2144, 0.06666667
        %v2197 = vmul.f32 %v2145, 0.06666667
        %v2198 = vmul.f32 %v2146, 0.06666667
        %v2199 = vrsqrt.pop %v2195
        %v2200 = vmul.f32 %v2195, %v2199
        %vm2201 = vcmp.eq.f32.partialorder %v2195, inf
        %v2202 = vsel %vm2201, %v2195, %v2200
        %vm2203 = vcmp.eq.f32.partialorder %v2195, 0.0
        %v2204 = vand.u32 %v2195, 2147483648
        %v2205 = vsel %vm2203, %v2204, %v2202
        %v2206 = vrsqrt.pop %v2196
        %v2207 = vmul.f32 %v2196, %v2206
        %vm2208 = vcmp.eq.f32.partialorder %v2196, inf
        %v2209 = vsel %vm2208, %v2196, %v2207
        %vm2210 = vcmp.eq.f32.partialorder %v2196, 0.0
        %v2211 = vand.u32 %v2196, 2147483648
        %v2212 = vsel %vm2210, %v2211, %v2209
        %v2213 = vrsqrt.pop %v2197
        %v2214 = vmul.f32 %v2197, %v2213
        %vm2215 = vcmp.eq.f32.partialorder %v2197, inf
        %v2216 = vsel %vm2215, %v2197, %v2214
        %vm2217 = vcmp.eq.f32.partialorder %v2197, 0.0
        %v2218 = vand.u32 %v2197, 2147483648
        %v2219 = vsel %vm2217, %v2218, %v2216
        %v2220 = vrsqrt.pop %v2198
        %v2221 = vmul.f32 %v2198, %v2220
        %vm2222 = vcmp.eq.f32.partialorder %v2198, inf
        %v2223 = vsel %vm2222, %v2198, %v2221
        %vm2224 = vcmp.eq.f32.partialorder %v2198, 0.0
        %v2225 = vand.u32 %v2198, 2147483648
        %v2226 = vsel %vm2224, %v2225, %v2223
        %v2227 = vadd.f32 %v2205, 1e-06
        %v2228 = vadd.f32 %v2212, 1e-06
        %v2229 = vadd.f32 %v2219, 1e-06
        %v2230 = vadd.f32 %v2226, 1e-06
        %v2231 = vrcp.pop %v2191
        %v2232 = vmul.f32 1.0, %v2231
        %v2233 = vrcp.pop %v2192
        %v2234 = vmul.f32 1.0, %v2233
        %v2235 = vrcp.pop %v2193
        %v2236 = vmul.f32 1.0, %v2235
        %v2237 = vrcp.pop %v2194
        %v2238 = vmul.f32 1.0, %v2237
        %v2239 = vrcp.pop %v2227
        %v2240 = vmul.f32 1.0, %v2239
        %v2241 = vrcp.pop %v2228
        %v2242 = vmul.f32 1.0, %v2241
        %v2243 = vrcp.pop %v2229
        %v2244 = vmul.f32 1.0, %v2243
        %v2245 = vrcp.pop %v2230
        %v2246 = vmul.f32 1.0, %v2245
        %v2247 = vmul.f32 %v2127, %v2232
        %v2248 = vmul.f32 %v2128, %v2234
        %v2249 = vmul.f32 %v2129, %v2236
        %v2250 = vmul.f32 %v2130, %v2238
        %v2251 = vmul.f32 %v2247, %v2232
        %v2252 = vmul.f32 %v2248, %v2234
        %v2253 = vmul.f32 %v2249, %v2236
        %v2254 = vmul.f32 %v2250, %v2238
        %v2255 = vmul.f32 %v2143, %v2240
        %v2256 = vmul.f32 %v2144, %v2242
        %v2257 = vmul.f32 %v2145, %v2244
        %v2258 = vmul.f32 %v2146, %v2246
        %v2259 = vmul.f32 %v2255, %v2240
        %v2260 = vmul.f32 %v2256, %v2242
        %v2261 = vmul.f32 %v2257, %v2244
        %v2262 = vmul.f32 %v2258, %v2246
        %v2263 = vadd.f32 %v2251, %v2259
        %v2264 = vadd.f32 %v2252, %v2260
        %v2265 = vadd.f32 %v2253, %v2261
        %v2266 = vadd.f32 %v2254, %v2262
        %v2267 = vmul.f32 %v2155, 2.0
        %v2268 = vmul.f32 %v2156, 2.0
        %v2269 = vmul.f32 %v2157, 2.0
        %v2270 = vmul.f32 %v2158, 2.0
        %v2271 = vmul.f32 %v2267, %v2232
        %v2272 = vmul.f32 %v2268, %v2234
        %v2273 = vmul.f32 %v2269, %v2236
        %v2274 = vmul.f32 %v2270, %v2238
        %v2275 = vmul.f32 %v2271, %v2240
        %v2276 = vmul.f32 %v2272, %v2242
        %v2277 = vmul.f32 %v2273, %v2244
        %v2278 = vmul.f32 %v2274, %v2246
        %v2279 = vsub.f32 %v2263, %v2275
        %v2280 = vsub.f32 %v2264, %v2276
        %v2281 = vsub.f32 %v2265, %v2277
        %v2282 = vsub.f32 %v2266, %v2278
        %v2283 = vsel %vm632, %v2280, 0.0
        %v2284 = vadd.f32 %v2279, %v2283
        %vm2285 = vcmask 1040384
        %v2286 = vsel %vm2285, %v2281, 0.0
        %v2287 = vadd.f32 %v2284, %v2286
        %vm2288 = vcmask 122880
        %v2289 = vsel %vm2288, %v2282, 0.0
        %v2290 = vadd.f32 %v2287, %v2289
        %2291 = vadd.xlane.f32.xlu0 %v2290
        %v2292 = vpop.xlane.xlu0 %2291
        %v2293 = vrot.slane %v2292, 4
        %v2294 = vadd.f32 %v2292, %v2293
        %v2295 = vrot.slane %v2294, 2
        %v2296 = vadd.f32 %v2294, %v2295
        %v2297 = vrot.slane %v2296, 1
        %v2298 = vadd.f32 %v2296, %v2297
        %s2299 = vtos %v2298
        %v2300 = vlaneseq
        %v2301 = vshrl.u32 %v2300, 7
        %vm2302 = vcmp.eq.s32.totalorder %v2301, 0
        %v2303 = vstv %s735
        %v2304 = vsel %vm2302, %v2303, 0.0
        %vm2305 = vcmp.eq.s32.totalorder %v2301, 1
        %v2306 = vstv %s1088
        %v2307 = vsel %vm2305, %v2306, 0.0
        %v2308 = vadd.f32 %v2304, %v2307
        %vm2309 = vcmp.eq.s32.totalorder %v2301, 2
        %v2310 = vstv %s1260
        %v2311 = vsel %vm2309, %v2310, 0.0
        %v2312 = vadd.f32 %v2308, %v2311
        %vm2313 = vcmp.eq.s32.totalorder %v2301, 3
        %v2314 = vstv %s2299
        %v2315 = vsel %vm2313, %v2314, 0.0
        %v2316 = vadd.f32 %v2312, %v2315
        %2317 = vst [vmem:[%s471] sm:$0xff] %v2316
        %s2318 = sand.u32 %s300, 1
        %s2319 = scalar_lea.sflag [#allocation4], %s2318
        %s2320 = sand.u32 %s300, 1
        %s2321 = smul.addr %s2320, 8
        %s2322 = scalar_lea.vmem [#allocation8], %s2321
        // Predicated region
        $region81: #{tpu_custom_call.1} parent=67 // pred_check
          %p2323 = pneg %p310
        $region82: #{tpu_custom_call.1} parent=67 // pred_check_branch
          %2325 = sbr.rel (%p2323) target = $region84
        $region83: #{tpu_custom_call.1} parent=67 // pred_region
          %s2327 = ssub.s32 128, 128
          %2328 = vsyncadd %s2319, %s2327
          %s2329 = smul.addr %s30, 128
          %s2330 = scalar_lea.hbm %s12, %s2329
          %s2332 = sshll.u32 %s2322, 4
          %s2333 = int_to_ptr.vmem [resolvable:$true] %s2332
          %2335 = dma.vmem_to_hbm [thread:$0]  %s2333, 128, %s2330, %s2319
        $region84: #{tpu_custom_call.1} parent=67 // pred_fallthru
          _
      $region68: #{tpu_custom_call.1} parent=5 // pred_fallthru
        _
      %p2336 = scmp.le.s32.totalorder 2, %s25
      // Predicated region
      $region85: #{tpu_custom_call.1} parent=5 // pred_check
        %p2337 = pneg %p2336
      $region86: #{tpu_custom_call.1} parent=5 // pred_check_branch
        %2339 = sbr.rel (%p2337) target = $region88
      $region87: #{tpu_custom_call.1} parent=5 // pred_region
        %s2340 = ssub.s32 %s25, 2
        // Predicated region
        $region89: #{tpu_custom_call.1} parent=87 // pred_check
          %p2341 = pneg %p316
        $region90: #{tpu_custom_call.1} parent=87 // pred_check_branch
          %2343 = sbr.rel (%p2341) target = $region92
        $region91: #{tpu_custom_call.1} parent=87 // pred_region
          %s2344 = sand.u32 %s301, 1
          %s2345 = scalar_lea.sflag [#allocation4], %s2344
          %s2346 = sand.u32 %s301, 1
          %s2347 = smul.addr %s2346, 8
          %s2348 = scalar_lea.vmem [#allocation8], %s2347
          %2349 = dma.done %s2345, 128
        $region92: #{tpu_custom_call.1} parent=87 // pred_fallthru
          _
      $region88: #{tpu_custom_call.1} parent=5 // pred_fallthru
        _
    $region6: #{tpu_custom_call.1} parent=1 // loop_footer
      %s29 = sadd.s32 1, %s25
    $region7: #{tpu_custom_call.1} parent=1 // loop_footer_branch
      %24 = sbr.rel target = $region3
    $region8: #{tpu_custom_call.1} parent=1 // loop_exit
      _
    %2350 = vsyncpa [#allocation3], 1
    %s2351 = scalar_lea.sflag [#allocation3], 1
    %2352 = vsyncpa %s2351, 1
    %2353 = vsyncpa [#allocation6], 1
    %2354 = vsyncpa [#allocation4], 1
    %s2355 = scalar_lea.sflag [#allocation4], 1
    %2356 = vsyncpa %s2355, 1

</llo_original>
